<compile_context>
chip_gen: v7x
topology: tpu7x:2x2x1
jax: 0.10.0
libtpu: 0.0.40
codegen_flags: <defaults>
</compile_context>

<pallas_src>
import jax
import jax.numpy as jnp
from jax.experimental import pallas as pl
from jax.experimental.pallas import tpu as pltpu

L1 = 384
L2 = 8
L3 = 16
NUM_PT = 12
NUM_SQ = 64
NUM_INPUTS = NUM_SQ * NUM_PT  # 768

LANE = 128     # lane-padded width for the tiny tail layers
OUT_W = 8      # narrow output width (full-dim block); column 0 is the result
SUBLANE = 16   # batch-tile alignment (covers f32 (8,128) and bf16 (16,128) tiling)


def _cdiv(a, b):
    return -(-a // b)


def _round_up(x, m):
    return ((x + m - 1) // m) * m


# --------------------------------------------------------------------------
# Kernel
# --------------------------------------------------------------------------
def nnue_kernel(ut_ref, w_in_ref, b_in_ref,
                wi_ref, bi_ref,
                w1a_ref, w1b_ref, b1_ref,
                w2_ref, b2_ref,
                wo_ref, bo_ref,
                out_ref):
    # Feature transformer (dominant FLOPs): bf16 x bf16 -> f32 on the MXU.
    wi = wi_ref[...]            # (768, 384) bf16, VMEM-resident across steps
    bi = bi_ref[...]            # (1, 384)   f32
    w = jnp.dot(w_in_ref[...], wi, preferred_element_type=jnp.float32) + bi
    b = jnp.dot(b_in_ref[...], wi, preferred_element_type=jnp.float32) + bi

    # Perspective mixing + clamp in f32 (portable to v5e's f32-only VPU);
    # broadcasts hoisted (JAX does not CSE broadcast_in_dim).
    ut = ut_ref[...]                                   # (TM, 2) f32
    us = jnp.broadcast_to(ut[:, 0:1], w.shape)         # (TM, 384)
    them = jnp.broadcast_to(ut[:, 1:2], w.shape)       # (TM, 384)

    # TODO(synk): if the caller guarantees them == 1 - us, the mix could be
    # simplified to t = us*(w-b); l0a = b+t; l0b = w-t (fewer VALU ops).
    l0a = jnp.clip(us * w + them * b, 0.0, 1.0).astype(jnp.bfloat16)  # cat(w,b) half
    l0b = jnp.clip(us * b + them * w, 0.0, 1.0).astype(jnp.bfloat16)  # cat(b,w) half

    # l1: split-K bf16 matmul over the two halves; weights lane-padded to 128.
    l1 = jnp.clip(
        jnp.dot(l0a, w1a_ref[...], preferred_element_type=jnp.float32)
        + jnp.dot(l0b, w1b_ref[...], preferred_element_type=jnp.float32)
        + b1_ref[...],
        0.0, 1.0).astype(jnp.bfloat16)                 # (TM, 128), cols >= 8 are 0

    l2 = jnp.clip(
        jnp.dot(l1, w2_ref[...], preferred_element_type=jnp.float32)
        + b2_ref[...],
        0.0, 1.0).astype(jnp.bfloat16)                 # (TM, 128), cols >= 16 are 0

    # Narrow (TM, 8) output block; only column 0 is meaningful (wrapper slices).
    out_ref[...] = (jnp.dot(l2, wo_ref[...], preferred_element_type=jnp.float32)
                    + bo_ref[...])


# --------------------------------------------------------------------------
# Parameter packing (done once, outside the kernel)
# --------------------------------------------------------------------------
def pack_params(params):
    """bf16 weights everywhere (f32 MXU accumulation); split + pad tail layers."""
    wi, bi, w1, b1, w2, b2, wo, bo = params
    bf16, f32 = jnp.bfloat16, jnp.float32

    wi_bf = wi.astype(bf16)                                                # (768, 384)
    w1a = jnp.zeros((L1, LANE), bf16).at[:, :L2].set(w1[:L1].astype(bf16))  # (384, 128)
    w1b = jnp.zeros((L1, LANE), bf16).at[:, :L2].set(w1[L1:].astype(bf16))  # (384, 128)
    b1p = jnp.zeros((1, LANE), f32).at[:, :L2].set(b1)                     # (1, 128)
    w2p = jnp.zeros((LANE, LANE), bf16).at[:L2, :L3].set(w2.astype(bf16))  # (128, 128)
    b2p = jnp.zeros((1, LANE), f32).at[:, :L3].set(b2)                     # (1, 128)
    wop = jnp.zeros((LANE, OUT_W), bf16).at[:L3, :1].set(wo.astype(bf16))  # (128, 8)
    bop = jnp.zeros((1, OUT_W), f32).at[:, :1].set(bo)                     # (1, 8)
    return (wi_bf, bi.astype(f32), w1a, w1b, b1p, w2p, b2p, wop, bop)


# --------------------------------------------------------------------------
# Wrapper
# --------------------------------------------------------------------------
def nnue_forward(us, them, w_in, b_in, packed_params, *, tm=1024):
    """Forward pass. `tm` is the maximum batch tile per grid step."""
    wi, bi, w1a, w1b, b1, w2, b2, wo, bo = packed_params
    B = w_in.shape[0]

    # At least 2 grid steps (so v7x can shard the "parallel" axis across both
    # TensorCores), and balance the tile across the steps so padding waste is
    # < SUBLANE rows per step instead of up to a whole tile.
    num_steps = max(2, _cdiv(B, tm))
    tm_eff = _round_up(_cdiv(B, num_steps), SUBLANE)
    b_pad = num_steps * tm_eff
    grid = (num_steps,)

    def pad_rows(x):
        return jnp.pad(x, ((0, b_pad - B), (0, 0))) if b_pad != B else x

    # us/them packed into one (B, 2) array -> one narrow DMA per step.
    ut_p = pad_rows(jnp.concatenate(
        [us.astype(jnp.float32), them.astype(jnp.float32)], axis=1))
    w_in_p = pad_rows(w_in.astype(jnp.bfloat16))   # {0,1} features: bf16 exact
    b_in_p = pad_rows(b_in.astype(jnp.bfloat16))

    # Per-batch-tile blocks (pipelined); weights pinned to block (0,0) so they
    # stay VMEM-resident and are DMA'd only once.
    # TODO(synk): pipeline_mode=pl.Buffered(1) on the constant weight specs
    # would halve their VMEM footprint; skipped to keep lowering conservative.
    tile = lambda shape: pl.BlockSpec(shape, lambda i: (i, 0))
    const = lambda shape: pl.BlockSpec(shape, lambda i: (0, 0))

    in_specs = [
        tile((tm_eff, 2)),            # ut = [us, them]
        tile((tm_eff, NUM_INPUTS)),   # w_in (bf16)
        tile((tm_eff, NUM_INPUTS)),   # b_in (bf16)
        const((NUM_INPUTS, L1)),      # wi  (bf16)
        const((1, L1)),               # bi
        const((L1, LANE)),            # w1a (bf16)
        const((L1, LANE)),            # w1b (bf16)
        const((1, LANE)),             # b1
        const((LANE, LANE)),          # w2  (bf16)
        const((1, LANE)),             # b2
        const((LANE, OUT_W)),         # wo  (bf16)
        const((1, OUT_W)),            # bo
    ]
    out_spec = tile((tm_eff, OUT_W))

    param_bytes = sum(int(p.size) * p.dtype.itemsize for p in packed_params)
    flops = (2 * 2 * b_pad * NUM_INPUTS * L1       # feature transformer (x2)
             + 2 * 2 * b_pad * L1 * LANE           # l1 split-K (x2)
             + 2 * b_pad * LANE * LANE             # l2 (padded)
             + 2 * b_pad * LANE * OUT_W)           # output (padded)
    bytes_accessed = (2 * b_pad * NUM_INPUTS * 2   # bf16 inputs
                      + b_pad * 2 * 4              # packed us/them
                      + b_pad * OUT_W * 4          # narrow output
                      + param_bytes)

    out_padded = pl.pallas_call(
        nnue_kernel,
        out_shape=jax.ShapeDtypeStruct((b_pad, OUT_W), jnp.float32),
        grid=grid,
        in_specs=in_specs,
        out_specs=out_spec,
        compiler_params=pltpu.CompilerParams(
            dimension_semantics=("parallel",),
            vmem_limit_bytes=48 * 1024 * 1024,
        ),
        cost_estimate=pl.CostEstimate(
            flops=int(flops), transcendentals=0,
            bytes_accessed=int(bytes_accessed)),
    )(ut_p, w_in_p, b_in_p, wi, bi, w1a, w1b, b1, w2, b2, wo, bo)

    return out_padded[:B, :1]


# --------------------------------------------------------------------------
# Init + reference
# --------------------------------------------------------------------------
def init_params(key):
    """nn.Linear-style uniform init; weights stored as (in_features, out_features)."""
    def linear(key, fan_in, fan_out):
        kw, kb = jax.random.split(key)
        bound = 1.0 / jnp.sqrt(fan_in)
        w = jax.random.uniform(kw, (fan_in, fan_out), jnp.float32, -bound, bound)
        b = jax.random.uniform(kb, (1, fan_out), jnp.float32, -bound, bound)
        return w, b

    k0, k1, k2, k3 = jax.random.split(key, 4)
    wi, bi = linear(k0, NUM_INPUTS, L1)
    w1, b1 = linear(k1, 2 * L1, L2)
    w2, b2 = linear(k2, L2, L3)
    wo, bo = linear(k3, L3, 1)
    return (wi, bi, w1, b1, w2, b2, wo, bo)


def nnue_reference(us, them, w_in, b_in, params):
    """Pure-JAX reference mirroring the kernel's bf16 quantization steps."""
    wi, bi, w1, b1, w2, b2, wo, bo = params
    bf = lambda x: x.astype(jnp.bfloat16)
    f32 = jnp.float32
    w = jnp.dot(bf(w_in), bf(wi), preferred_element_type=f32) + bi
    b = jnp.dot(bf(b_in), bf(wi), preferred_element_type=f32) + bi
    l0 = jnp.clip(us * jnp.concatenate([w, b], 1)
                  + them * jnp.concatenate([b, w], 1), 0.0, 1.0)
    l1 = jnp.clip(jnp.dot(bf(l0), bf(w1), preferred_element_type=f32) + b1, 0.0, 1.0)
    l2 = jnp.clip(jnp.dot(bf(l1), bf(w2), preferred_element_type=f32) + b2, 0.0, 1.0)
    return jnp.dot(bf(l2), bf(wo), preferred_element_type=f32) + bo


# TODO(synk): clamp_weights() is a training-time utility (weight clipping), not
# part of the forward pass, so it is intentionally not implemented here.

if __name__ == "__main__":
    key = jax.random.PRNGKey(0)
    k_p, k_us, k_w, k_b = jax.random.split(key, 4)

    B = 12  # not a multiple of the tile -> exercises padding + >=2 grid steps
    params = init_params(k_p)
    packed = pack_params(params)

    us = jax.random.bernoulli(k_us, 0.5, (B, 1)).astype(jnp.float32)
    them = 1.0 - us
    w_in = jax.random.bernoulli(k_w, 0.05, (B, NUM_INPUTS)).astype(jnp.float32)
    b_in = jax.random.bernoulli(k_b, 0.05, (B, NUM_INPUTS)).astype(jnp.float32)

    out = nnue_forward(us, them, w_in, b_in, packed)
    out = jax.block_until_ready(out)

    ref = nnue_reference(us, them, w_in, b_in, params)
    assert out.shape == (B, 1)
    assert jnp.allclose(out, ref, rtol=2e-3, atol=2e-3), \
        float(jnp.max(jnp.abs(out - ref)))

    print("KERNEL_OK")
</pallas_src>

<mosaic_0001>
module attributes {stable_mosaic.version = 11 : i64} {
  func.func @nnue_kernel(%arg0: i32, %arg1: memref<16x2xf32, #tpu.memory_space<vmem>>, %arg2: memref<16x768xbf16, #tpu.memory_space<vmem>>, %arg3: memref<16x768xbf16, #tpu.memory_space<vmem>>, %arg4: memref<768x384xbf16, #tpu.memory_space<vmem>>, %arg5: memref<1x384xf32, #tpu.memory_space<vmem>>, %arg6: memref<384x128xbf16, #tpu.memory_space<vmem>>, %arg7: memref<384x128xbf16, #tpu.memory_space<vmem>>, %arg8: memref<1x128xf32, #tpu.memory_space<vmem>>, %arg9: memref<128x128xbf16, #tpu.memory_space<vmem>>, %arg10: memref<1x128xf32, #tpu.memory_space<vmem>>, %arg11: memref<128x8xbf16, #tpu.memory_space<vmem>>, %arg12: memref<1x8xf32, #tpu.memory_space<vmem>>, %arg13: memref<16x8xf32, #tpu.memory_space<vmem>>) attributes {dimension_semantics = [#tpu.dimension_semantics<parallel>], iteration_bounds = array<i64: 2>, scalar_prefetch = 0 : i64, scratch_operands = 0 : i64, tpu.core_type = #tpu.core_type<tc>, window_params = [{transform_indices = @transform_0, window_bounds = array<i64: 16, 2>}, {transform_indices = @transform_1, window_bounds = array<i64: 16, 768>}, {transform_indices = @transform_2, window_bounds = array<i64: 16, 768>}, {pipeline_mode = #tpu.pipeline_mode<synchronous>, transform_indices = @transform_3, window_bounds = array<i64: 768, 384>}, {pipeline_mode = #tpu.pipeline_mode<synchronous>, transform_indices = @transform_4, window_bounds = array<i64: 1, 384>}, {pipeline_mode = #tpu.pipeline_mode<synchronous>, transform_indices = @transform_5, window_bounds = array<i64: 384, 128>}, {pipeline_mode = #tpu.pipeline_mode<synchronous>, transform_indices = @transform_6, window_bounds = array<i64: 384, 128>}, {pipeline_mode = #tpu.pipeline_mode<synchronous>, transform_indices = @transform_7, window_bounds = array<i64: 1, 128>}, {pipeline_mode = #tpu.pipeline_mode<synchronous>, transform_indices = @transform_8, window_bounds = array<i64: 128, 128>}, {pipeline_mode = #tpu.pipeline_mode<synchronous>, transform_indices = @transform_9, window_bounds = array<i64: 1, 128>}, {pipeline_mode = #tpu.pipeline_mode<synchronous>, transform_indices = @transform_10, window_bounds = array<i64: 128, 8>}, {pipeline_mode = #tpu.pipeline_mode<synchronous>, transform_indices = @transform_11, window_bounds = array<i64: 1, 8>}, {transform_indices = @transform_12, window_bounds = array<i64: 16, 8>}]} {
    %c0 = arith.constant 0 : index
    %c0_0 = arith.constant 0 : index
    %0 = vector.load %arg4[%c0, %c0_0] : memref<768x384xbf16, #tpu.memory_space<vmem>>, vector<768x384xbf16>
    %c0_1 = arith.constant 0 : index
    %c0_2 = arith.constant 0 : index
    %1 = vector.load %arg5[%c0_1, %c0_2] : memref<1x384xf32, #tpu.memory_space<vmem>>, vector<1x384xf32>
    %c0_3 = arith.constant 0 : index
    %c0_4 = arith.constant 0 : index
    %2 = vector.load %arg2[%c0_3, %c0_4] : memref<16x768xbf16, #tpu.memory_space<vmem>>, vector<16x768xbf16>
    %cst = arith.constant dense<0.000000e+00> : vector<16x384xf32>
    %3 = tpu.matmul %2, %0, %cst {dimension_numbers = #tpu.dot_dimension_numbers<[1], [0], [0], [1], [0, 0, 1, 1], [], []>} : vector<16x768xbf16>, vector<768x384xbf16>, vector<16x384xf32> -> vector<16x384xf32>
    %4 = vector.broadcast %1 : vector<1x384xf32> to vector<16x384xf32>
    %5 = arith.addf %3, %4 : vector<16x384xf32>
    %c0_5 = arith.constant 0 : index
    %c0_6 = arith.constant 0 : index
    %6 = vector.load %arg3[%c0_5, %c0_6] : memref<16x768xbf16, #tpu.memory_space<vmem>>, vector<16x768xbf16>
    %cst_7 = arith.constant dense<0.000000e+00> : vector<16x384xf32>
    %7 = tpu.matmul %6, %0, %cst_7 {dimension_numbers = #tpu.dot_dimension_numbers<[1], [0], [0], [1], [0, 0, 1, 1], [], []>} : vector<16x768xbf16>, vector<768x384xbf16>, vector<16x384xf32> -> vector<16x384xf32>
    %8 = vector.broadcast %1 : vector<1x384xf32> to vector<16x384xf32>
    %9 = arith.addf %7, %8 : vector<16x384xf32>
    %c0_8 = arith.constant 0 : index
    %c0_9 = arith.constant 0 : index
    %10 = vector.load %arg1[%c0_8, %c0_9] : memref<16x2xf32, #tpu.memory_space<vmem>>, vector<16x2xf32>
    %11 = vector.extract_strided_slice %10 {offsets = [0, 0], sizes = [16, 1], strides = [1, 1]} : vector<16x2xf32> to vector<16x1xf32>
    %12 = vector.shape_cast %11 : vector<16x1xf32> to vector<16x1xf32>
    %13 = vector.broadcast %12 : vector<16x1xf32> to vector<16x384xf32>
    %14 = vector.extract_strided_slice %10 {offsets = [0, 1], sizes = [16, 1], strides = [1, 1]} : vector<16x2xf32> to vector<16x1xf32>
    %15 = vector.shape_cast %14 : vector<16x1xf32> to vector<16x1xf32>
    %16 = vector.broadcast %15 : vector<16x1xf32> to vector<16x384xf32>
    %17 = arith.mulf %13, %5 : vector<16x384xf32>
    %18 = arith.mulf %16, %9 : vector<16x384xf32>
    %19 = arith.addf %17, %18 : vector<16x384xf32>
    %cst_10 = arith.constant 0.000000e+00 : f32
    %cst_11 = arith.constant 1.000000e+00 : f32
    %20 = vector.broadcast %cst_10 : f32 to vector<16x384xf32>
    %21 = arith.maximumf %20, %19 : vector<16x384xf32>
    %22 = vector.broadcast %cst_11 : f32 to vector<16x384xf32>
    %23 = arith.minimumf %22, %21 : vector<16x384xf32>
    %24 = arith.truncf %23 : vector<16x384xf32> to vector<16x384xbf16>
    %25 = arith.mulf %13, %9 : vector<16x384xf32>
    %26 = arith.mulf %16, %5 : vector<16x384xf32>
    %27 = arith.addf %25, %26 : vector<16x384xf32>
    %cst_12 = arith.constant 0.000000e+00 : f32
    %cst_13 = arith.constant 1.000000e+00 : f32
    %28 = vector.broadcast %cst_12 : f32 to vector<16x384xf32>
    %29 = arith.maximumf %28, %27 : vector<16x384xf32>
    %30 = vector.broadcast %cst_13 : f32 to vector<16x384xf32>
    %31 = arith.minimumf %30, %29 : vector<16x384xf32>
    %32 = arith.truncf %31 : vector<16x384xf32> to vector<16x384xbf16>
    %c0_14 = arith.constant 0 : index
    %c0_15 = arith.constant 0 : index
    %33 = vector.load %arg6[%c0_14, %c0_15] : memref<384x128xbf16, #tpu.memory_space<vmem>>, vector<384x128xbf16>
    %cst_16 = arith.constant dense<0.000000e+00> : vector<16x128xf32>
    %34 = tpu.matmul %24, %33, %cst_16 {dimension_numbers = #tpu.dot_dimension_numbers<[1], [0], [0], [1], [0, 0, 1, 1], [], []>} : vector<16x384xbf16>, vector<384x128xbf16>, vector<16x128xf32> -> vector<16x128xf32>
    %c0_17 = arith.constant 0 : index
    %c0_18 = arith.constant 0 : index
    %35 = vector.load %arg7[%c0_17, %c0_18] : memref<384x128xbf16, #tpu.memory_space<vmem>>, vector<384x128xbf16>
    %cst_19 = arith.constant dense<0.000000e+00> : vector<16x128xf32>
    %36 = tpu.matmul %32, %35, %cst_19 {dimension_numbers = #tpu.dot_dimension_numbers<[1], [0], [0], [1], [0, 0, 1, 1], [], []>} : vector<16x384xbf16>, vector<384x128xbf16>, vector<16x128xf32> -> vector<16x128xf32>
    %37 = arith.addf %34, %36 : vector<16x128xf32>
    %c0_20 = arith.constant 0 : index
    %c0_21 = arith.constant 0 : index
    %38 = vector.load %arg8[%c0_20, %c0_21] : memref<1x128xf32, #tpu.memory_space<vmem>>, vector<1x128xf32>
    %39 = vector.broadcast %38 : vector<1x128xf32> to vector<16x128xf32>
    %40 = arith.addf %37, %39 : vector<16x128xf32>
    %cst_22 = arith.constant 0.000000e+00 : f32
    %cst_23 = arith.constant 1.000000e+00 : f32
    %41 = vector.broadcast %cst_22 : f32 to vector<16x128xf32>
    %42 = arith.maximumf %41, %40 : vector<16x128xf32>
    %43 = vector.broadcast %cst_23 : f32 to vector<16x128xf32>
    %44 = arith.minimumf %43, %42 : vector<16x128xf32>
    %45 = arith.truncf %44 : vector<16x128xf32> to vector<16x128xbf16>
    %c0_24 = arith.constant 0 : index
    %c0_25 = arith.constant 0 : index
    %46 = vector.load %arg9[%c0_24, %c0_25] : memref<128x128xbf16, #tpu.memory_space<vmem>>, vector<128x128xbf16>
    %cst_26 = arith.constant dense<0.000000e+00> : vector<16x128xf32>
    %47 = tpu.matmul %45, %46, %cst_26 {dimension_numbers = #tpu.dot_dimension_numbers<[1], [0], [0], [1], [0, 0, 1, 1], [], []>} : vector<16x128xbf16>, vector<128x128xbf16>, vector<16x128xf32> -> vector<16x128xf32>
    %c0_27 = arith.constant 0 : index
    %c0_28 = arith.constant 0 : index
    %48 = vector.load %arg10[%c0_27, %c0_28] : memref<1x128xf32, #tpu.memory_space<vmem>>, vector<1x128xf32>
    %49 = vector.broadcast %48 : vector<1x128xf32> to vector<16x128xf32>
    %50 = arith.addf %47, %49 : vector<16x128xf32>
    %cst_29 = arith.constant 0.000000e+00 : f32
    %cst_30 = arith.constant 1.000000e+00 : f32
    %51 = vector.broadcast %cst_29 : f32 to vector<16x128xf32>
    %52 = arith.maximumf %51, %50 : vector<16x128xf32>
    %53 = vector.broadcast %cst_30 : f32 to vector<16x128xf32>
    %54 = arith.minimumf %53, %52 : vector<16x128xf32>
    %55 = arith.truncf %54 : vector<16x128xf32> to vector<16x128xbf16>
    %c0_31 = arith.constant 0 : index
    %c0_32 = arith.constant 0 : index
    %56 = vector.load %arg11[%c0_31, %c0_32] : memref<128x8xbf16, #tpu.memory_space<vmem>>, vector<128x8xbf16>
    %cst_33 = arith.constant dense<0.000000e+00> : vector<16x8xf32>
    %57 = tpu.matmul %55, %56, %cst_33 {dimension_numbers = #tpu.dot_dimension_numbers<[1], [0], [0], [1], [0, 0, 1, 1], [], []>} : vector<16x128xbf16>, vector<128x8xbf16>, vector<16x8xf32> -> vector<16x8xf32>
    %c0_34 = arith.constant 0 : index
    %c0_35 = arith.constant 0 : index
    %58 = vector.load %arg12[%c0_34, %c0_35] : memref<1x8xf32, #tpu.memory_space<vmem>>, vector<1x8xf32>
    %59 = vector.broadcast %58 : vector<1x8xf32> to vector<16x8xf32>
    %60 = arith.addf %57, %59 : vector<16x8xf32>
    %c0_36 = arith.constant 0 : index
    %c0_37 = arith.constant 0 : index
    %61 = vector.load %arg13[%c0_36, %c0_37] : memref<16x8xf32, #tpu.memory_space<vmem>>, vector<16x8xf32>
    tpu.vector_store %arg13[%c0_36, %c0_37], %60 {strides = array<i32>} : memref<16x8xf32, #tpu.memory_space<vmem>>, vector<16x8xf32>,
    return
  }
  func.func @transform_0(%arg0: i32) -> (i32, i32) {
    %c0_i32 = arith.constant 0 : i32
    %c0_i32_0 = arith.constant 0 : i32
    return %arg0, %c0_i32 : i32, i32
  }
  func.func @transform_1(%arg0: i32) -> (i32, i32) {
    %c0_i32 = arith.constant 0 : i32
    %c0_i32_0 = arith.constant 0 : i32
    return %arg0, %c0_i32 : i32, i32
  }
  func.func @transform_2(%arg0: i32) -> (i32, i32) {
    %c0_i32 = arith.constant 0 : i32
    %c0_i32_0 = arith.constant 0 : i32
    return %arg0, %c0_i32 : i32, i32
  }
  func.func @transform_3(%arg0: i32) -> (i32, i32) {
    %c0_i32 = arith.constant 0 : i32
    %c0_i32_0 = arith.constant 0 : i32
    %c0_i32_1 = arith.constant 0 : i32
    return %c0_i32, %c0_i32_0 : i32, i32
  }
  func.func @transform_4(%arg0: i32) -> (i32, i32) {
    %c0_i32 = arith.constant 0 : i32
    %c0_i32_0 = arith.constant 0 : i32
    %c0_i32_1 = arith.constant 0 : i32
    return %c0_i32, %c0_i32_0 : i32, i32
  }
  func.func @transform_5(%arg0: i32) -> (i32, i32) {
    %c0_i32 = arith.constant 0 : i32
    %c0_i32_0 = arith.constant 0 : i32
    %c0_i32_1 = arith.constant 0 : i32
    return %c0_i32, %c0_i32_0 : i32, i32
  }
  func.func @transform_6(%arg0: i32) -> (i32, i32) {
    %c0_i32 = arith.constant 0 : i32
    %c0_i32_0 = arith.constant 0 : i32
    %c0_i32_1 = arith.constant 0 : i32
    return %c0_i32, %c0_i32_0 : i32, i32
  }
  func.func @transform_7(%arg0: i32) -> (i32, i32) {
    %c0_i32 = arith.constant 0 : i32
    %c0_i32_0 = arith.constant 0 : i32
    %c0_i32_1 = arith.constant 0 : i32
    return %c0_i32, %c0_i32_0 : i32, i32
  }
  func.func @transform_8(%arg0: i32) -> (i32, i32) {
    %c0_i32 = arith.constant 0 : i32
    %c0_i32_0 = arith.constant 0 : i32
    %c0_i32_1 = arith.constant 0 : i32
    return %c0_i32, %c0_i32_0 : i32, i32
  }
  func.func @transform_9(%arg0: i32) -> (i32, i32) {
    %c0_i32 = arith.constant 0 : i32
    %c0_i32_0 = arith.constant 0 : i32
    %c0_i32_1 = arith.constant 0 : i32
    return %c0_i32, %c0_i32_0 : i32, i32
  }
  func.func @transform_10(%arg0: i32) -> (i32, i32) {
    %c0_i32 = arith.constant 0 : i32
    %c0_i32_0 = arith.constant 0 : i32
    %c0_i32_1 = arith.constant 0 : i32
    return %c0_i32, %c0_i32_0 : i32, i32
  }
  func.func @transform_11(%arg0: i32) -> (i32, i32) {
    %c0_i32 = arith.constant 0 : i32
    %c0_i32_0 = arith.constant 0 : i32
    %c0_i32_1 = arith.constant 0 : i32
    return %c0_i32, %c0_i32_0 : i32, i32
  }
  func.func @transform_12(%arg0: i32) -> (i32, i32) {
    %c0_i32 = arith.constant 0 : i32
    %c0_i32_0 = arith.constant 0 : i32
    return %arg0, %c0_i32 : i32, i32
  }
}

</mosaic_0001>

<llo_original>
// kernel: tpu_custom_call.1
$region0: #{tpu_custom_call.1}
  #allocation0 [shape = 'u32[]', space=smem, size = 0x4, offset = 0x4, fixed_abs, tag = 'smem constant byte address 0x4 - core index']
  #allocation1 [shape = 'u32[144,128]{1,0:T(1,128)}', space=vmem, size = 0x12000, scoped, tag = 'internal scratch']
  %s0 = inlined_call_operand.vmem [shape: f32[32,2], index: 0, kind: input, shape index: {}]
  %s1 = inlined_call_operand.vmem [shape: bf16[32,768], index: 1, kind: input, shape index: {}]
  %s2 = inlined_call_operand.hbm [shape: bf16[32,768], index: 2, kind: input, shape index: {}]
  %s3 = inlined_call_operand.hbm [shape: bf16[768,384], index: 3, kind: input, shape index: {}]
  %s4 = inlined_call_operand.vmem [shape: f32[1,384], index: 4, kind: input, shape index: {}]
  %s5 = inlined_call_operand.hbm [shape: bf16[384,128], index: 5, kind: input, shape index: {}]
  %s6 = inlined_call_operand.hbm [shape: bf16[384,128], index: 6, kind: input, shape index: {}]
  %s7 = inlined_call_operand.vmem [shape: f32[1,128], index: 7, kind: input, shape index: {}]
  %s8 = inlined_call_operand.hbm [shape: bf16[128,128], index: 8, kind: input, shape index: {}]
  %s9 = inlined_call_operand.vmem [shape: f32[1,128], index: 9, kind: input, shape index: {}]
  %s10 = inlined_call_operand.vmem [shape: bf16[128,8], index: 10, kind: input, shape index: {}]
  %s11 = inlined_call_operand.vmem [shape: f32[1,8], index: 11, kind: input, shape index: {}]
  %s12 = inlined_call_operand.vmem [shape: f32[32,8], index: 12, kind: output, shape index: {}]
  %s13 = sld [smem:[#allocation0]]
  $region101: #{tpu_custom_call.1} parent=0
    _
  %s15 = ssub.s32 1, %s13
  %s16 = scalar_select 0, %s15, %s13
  $region1: #{tpu_custom_call.1} parent=0
    #allocation2 [shape = 'u8[49152]{0}', space=vmem, size = 0xc000, scoped, tag = 'input window, operand 2']
    #allocation3 [shape = 's32[2]{0}', space=sflag, size = 0x8, scoped, tag = 'scoped memory for tpu_custom_call.1']
    #allocation4 [shape = 'u8[589824]{0}', space=vmem, size = 0x90000, scoped, tag = 'input window, operand 3, single buffered']
    #allocation5 [shape = 's32[1]{0}', space=sflag, size = 0x4, scoped, tag = 'scoped memory for tpu_custom_call.1']
    #allocation6 [shape = 'u8[98304]{0}', space=vmem, size = 0x18000, scoped, tag = 'input window, operand 5, single buffered']
    #allocation7 [shape = 'u8[98304]{0}', space=vmem, size = 0x18000, scoped, tag = 'input window, operand 6, single buffered']
    #allocation8 [shape = 's32[1]{0}', space=sflag, size = 0x4, scoped, tag = 'scoped memory for tpu_custom_call.1']
    #allocation9 [shape = 'u8[32768]{0}', space=vmem, size = 0x8000, scoped, tag = 'input window, operand 8, single buffered']
    %17 = vsyncpa [#allocation3], 0
    %s18 = scalar_lea.sflag [#allocation3], 1
    %19 = vsyncpa %s18, 0
    %20 = vsyncpa [#allocation5], 0
    %21 = vsyncpa [#allocation8], 0
    loop: start=0, step=1, limit=4
    $region2: #{tpu_custom_call.1} parent=1 // loop_pre_header
      _
    $region3: #{tpu_custom_call.1} parent=1 // loop_header
      %s23 = sphi 0, %s27
      %p24 = scmp.ge.s32.totalorder %s23, 4
      %s33 = sphi 0, %s35
      %s36 = sphi 0, %s33
      %s37 = sphi 0, %s36
      %s53 = sphi 0, %s37
      %s59 = sphi 0, %s61
      %s62 = sphi 0, %s59
      %s63 = sphi 0, %s62
      %s79 = sphi 0, %s63
      %s85 = sphi 0, %s87
      %s88 = sphi 0, %s85
      %s89 = sphi 0, %s88
      %s105 = sphi 0, %s89
      %s109 = sphi 0, %s109
      %s111 = sphi 0, %s109
      %s112 = sphi 0, %s111
      %s126 = sphi 0, %s112
      %s130 = sphi 0, %s130
      %s132 = sphi 0, %s130
      %s133 = sphi 0, %s132
      %s147 = sphi 0, %s133
      %s151 = sphi 0, %s151
      %s153 = sphi 0, %s151
      %s154 = sphi 0, %s153
      %s168 = sphi 0, %s154
      %s172 = sphi 0, %s172
      %s174 = sphi 0, %s172
      %s175 = sphi 0, %s174
      %s189 = sphi 0, %s175
      %s193 = sphi 0, %s193
      %s195 = sphi 0, %s193
      %s196 = sphi 0, %s195
      %s210 = sphi 0, %s196
      %s214 = sphi 0, %s214
      %s216 = sphi 0, %s214
      %s217 = sphi 0, %s216
      %s231 = sphi 0, %s217
      %s235 = sphi 0, %s235
      %s237 = sphi 0, %s235
      %s238 = sphi 0, %s237
      %s252 = sphi 0, %s238
      %s256 = sphi 0, %s256
      %s258 = sphi 0, %s256
      %s259 = sphi 0, %s258
      %s273 = sphi 0, %s259
      %s277 = sphi 0, %s277
      %s279 = sphi 0, %s277
      %s280 = sphi 0, %s279
      %s294 = sphi 0, %s280
      %s300 = sphi 0, %s302
      %s303 = sphi 0, %s300
      %s304 = sphi 0, %s303
      %s320 = sphi 0, %s304
    $region4: #{tpu_custom_call.1} parent=1 // loop_header_branch
      %26 = sbr.rel (%p24) target = $region8
    $region5: #{tpu_custom_call.1} parent=1 // loop_body
      %s28 = ssub.s32 %s23, 1
      %s29 = ssub.s32 %s23, 2
      %s30 = sadd.s32 %s23, 1
      %s31 = ssub.s32 %s23, %s30
      %p32 = scmp.eq.s32.totalorder %s31, 0
      %s34 = sadd.s32 %s33, 1
      %s35 = scalar_select %p32, %s33, %s34
      %p38 = pneg %p32
      %p39 = scmp.eq.s32.totalorder %s23, 1
      %p40 = por %p38, %p39
      %p41 = scmp.ne.s32.totalorder %s33, %s36
      %p42 = scmp.eq.s32.totalorder %s23, 0
      %p43 = por %p41, %p42
      %p44 = scmp.ne.s32.totalorder %s33, %s36
      %p45 = scmp.eq.s32.totalorder %s28, 1
      %p46 = por %p44, %p45
      %p47 = scmp.ne.s32.totalorder %s36, %s37
      %p48 = scmp.eq.s32.totalorder %s28, 0
      %p49 = por %p47, %p48
      %p50 = scmp.ne.s32.totalorder %s36, %s37
      %p51 = scmp.eq.s32.totalorder %s29, 1
      %p52 = por %p50, %p51
      %p54 = scmp.ne.s32.totalorder %s37, %s53
      %p55 = scmp.eq.s32.totalorder %s29, 0
      %p56 = por %p54, %p55
      %s57 = ssub.s32 %s23, %s30
      %p58 = scmp.eq.s32.totalorder %s57, 0
      %s60 = sadd.s32 %s59, 1
      %s61 = scalar_select %p58, %s59, %s60
      %p64 = pneg %p58
      %p65 = scmp.eq.s32.totalorder %s23, 1
      %p66 = por %p64, %p65
      %p67 = scmp.ne.s32.totalorder %s59, %s62
      %p68 = scmp.eq.s32.totalorder %s23, 0
      %p69 = por %p67, %p68
      %p70 = scmp.ne.s32.totalorder %s59, %s62
      %p71 = scmp.eq.s32.totalorder %s28, 1
      %p72 = por %p70, %p71
      %p73 = scmp.ne.s32.totalorder %s62, %s63
      %p74 = scmp.eq.s32.totalorder %s28, 0
      %p75 = por %p73, %p74
      %p76 = scmp.ne.s32.totalorder %s62, %s63
      %p77 = scmp.eq.s32.totalorder %s29, 1
      %p78 = por %p76, %p77
      %p80 = scmp.ne.s32.totalorder %s63, %s79
      %p81 = scmp.eq.s32.totalorder %s29, 0
      %p82 = por %p80, %p81
      %s83 = ssub.s32 %s23, %s30
      %p84 = scmp.eq.s32.totalorder %s83, 0
      %s86 = sadd.s32 %s85, 1
      %s87 = scalar_select %p84, %s85, %s86
      %p90 = pneg %p84
      %p91 = scmp.eq.s32.totalorder %s23, 1
      %p92 = por %p90, %p91
      %p93 = scmp.ne.s32.totalorder %s85, %s88
      %p94 = scmp.eq.s32.totalorder %s23, 0
      %p95 = por %p93, %p94
      %p96 = scmp.ne.s32.totalorder %s85, %s88
      %p97 = scmp.eq.s32.totalorder %s28, 1
      %p98 = por %p96, %p97
      %p99 = scmp.ne.s32.totalorder %s88, %s89
      %p100 = scmp.eq.s32.totalorder %s28, 0
      %p101 = por %p99, %p100
      %p102 = scmp.ne.s32.totalorder %s88, %s89
      %p103 = scmp.eq.s32.totalorder %s29, 1
      %p104 = por %p102, %p103
      %p106 = scmp.ne.s32.totalorder %s89, %s105
      %p107 = scmp.eq.s32.totalorder %s29, 0
      %p108 = por %p106, %p107
      %s110 = sadd.s32 %s109, 1
      %p113 = scmp.eq.s32.totalorder %s23, 1
      %p114 = scmp.ne.s32.totalorder %s109, %s111
      %p115 = scmp.eq.s32.totalorder %s23, 0
      %p116 = por %p114, %p115
      %p117 = scmp.ne.s32.totalorder %s109, %s111
      %p118 = scmp.eq.s32.totalorder %s28, 1
      %p119 = por %p117, %p118
      %p120 = scmp.ne.s32.totalorder %s111, %s112
      %p121 = scmp.eq.s32.totalorder %s28, 0
      %p122 = por %p120, %p121
      %p123 = scmp.ne.s32.totalorder %s111, %s112
      %p124 = scmp.eq.s32.totalorder %s29, 1
      %p125 = por %p123, %p124
      %p127 = scmp.ne.s32.totalorder %s112, %s126
      %p128 = scmp.eq.s32.totalorder %s29, 0
      %p129 = por %p127, %p128
      %s131 = sadd.s32 %s130, 1
      %p134 = scmp.eq.s32.totalorder %s23, 1
      %p135 = scmp.ne.s32.totalorder %s130, %s132
      %p136 = scmp.eq.s32.totalorder %s23, 0
      %p137 = por %p135, %p136
      %p138 = scmp.ne.s32.totalorder %s130, %s132
      %p139 = scmp.eq.s32.totalorder %s28, 1
      %p140 = por %p138, %p139
      %p141 = scmp.ne.s32.totalorder %s132, %s133
      %p142 = scmp.eq.s32.totalorder %s28, 0
      %p143 = por %p141, %p142
      %p144 = scmp.ne.s32.totalorder %s132, %s133
      %p145 = scmp.eq.s32.totalorder %s29, 1
      %p146 = por %p144, %p145
      %p148 = scmp.ne.s32.totalorder %s133, %s147
      %p149 = scmp.eq.s32.totalorder %s29, 0
      %p150 = por %p148, %p149
      %s152 = sadd.s32 %s151, 1
      %p155 = scmp.eq.s32.totalorder %s23, 1
      %p156 = scmp.ne.s32.totalorder %s151, %s153
      %p157 = scmp.eq.s32.totalorder %s23, 0
      %p158 = por %p156, %p157
      %p159 = scmp.ne.s32.totalorder %s151, %s153
      %p160 = scmp.eq.s32.totalorder %s28, 1
      %p161 = por %p159, %p160
      %p162 = scmp.ne.s32.totalorder %s153, %s154
      %p163 = scmp.eq.s32.totalorder %s28, 0
      %p164 = por %p162, %p163
      %p165 = scmp.ne.s32.totalorder %s153, %s154
      %p166 = scmp.eq.s32.totalorder %s29, 1
      %p167 = por %p165, %p166
      %p169 = scmp.ne.s32.totalorder %s154, %s168
      %p170 = scmp.eq.s32.totalorder %s29, 0
      %p171 = por %p169, %p170
      %s173 = sadd.s32 %s172, 1
      %p176 = scmp.eq.s32.totalorder %s23, 1
      %p177 = scmp.ne.s32.totalorder %s172, %s174
      %p178 = scmp.eq.s32.totalorder %s23, 0
      %p179 = por %p177, %p178
      %p180 = scmp.ne.s32.totalorder %s172, %s174
      %p181 = scmp.eq.s32.totalorder %s28, 1
      %p182 = por %p180, %p181
      %p183 = scmp.ne.s32.totalorder %s174, %s175
      %p184 = scmp.eq.s32.totalorder %s28, 0
      %p185 = por %p183, %p184
      %p186 = scmp.ne.s32.totalorder %s174, %s175
      %p187 = scmp.eq.s32.totalorder %s29, 1
      %p188 = por %p186, %p187
      %p190 = scmp.ne.s32.totalorder %s175, %s189
      %p191 = scmp.eq.s32.totalorder %s29, 0
      %p192 = por %p190, %p191
      %s194 = sadd.s32 %s193, 1
      %p197 = scmp.eq.s32.totalorder %s23, 1
      %p198 = scmp.ne.s32.totalorder %s193, %s195
      %p199 = scmp.eq.s32.totalorder %s23, 0
      %p200 = por %p198, %p199
      %p201 = scmp.ne.s32.totalorder %s193, %s195
      %p202 = scmp.eq.s32.totalorder %s28, 1
      %p203 = por %p201, %p202
      %p204 = scmp.ne.s32.totalorder %s195, %s196
      %p205 = scmp.eq.s32.totalorder %s28, 0
      %p206 = por %p204, %p205
      %p207 = scmp.ne.s32.totalorder %s195, %s196
      %p208 = scmp.eq.s32.totalorder %s29, 1
      %p209 = por %p207, %p208
      %p211 = scmp.ne.s32.totalorder %s196, %s210
      %p212 = scmp.eq.s32.totalorder %s29, 0
      %p213 = por %p211, %p212
      %s215 = sadd.s32 %s214, 1
      %p218 = scmp.eq.s32.totalorder %s23, 1
      %p219 = scmp.ne.s32.totalorder %s214, %s216
      %p220 = scmp.eq.s32.totalorder %s23, 0
      %p221 = por %p219, %p220
      %p222 = scmp.ne.s32.totalorder %s214, %s216
      %p223 = scmp.eq.s32.totalorder %s28, 1
      %p224 = por %p222, %p223
      %p225 = scmp.ne.s32.totalorder %s216, %s217
      %p226 = scmp.eq.s32.totalorder %s28, 0
      %p227 = por %p225, %p226
      %p228 = scmp.ne.s32.totalorder %s216, %s217
      %p229 = scmp.eq.s32.totalorder %s29, 1
      %p230 = por %p228, %p229
      %p232 = scmp.ne.s32.totalorder %s217, %s231
      %p233 = scmp.eq.s32.totalorder %s29, 0
      %p234 = por %p232, %p233
      %s236 = sadd.s32 %s235, 1
      %p239 = scmp.eq.s32.totalorder %s23, 1
      %p240 = scmp.ne.s32.totalorder %s235, %s237
      %p241 = scmp.eq.s32.totalorder %s23, 0
      %p242 = por %p240, %p241
      %p243 = scmp.ne.s32.totalorder %s235, %s237
      %p244 = scmp.eq.s32.totalorder %s28, 1
      %p245 = por %p243, %p244
      %p246 = scmp.ne.s32.totalorder %s237, %s238
      %p247 = scmp.eq.s32.totalorder %s28, 0
      %p248 = por %p246, %p247
      %p249 = scmp.ne.s32.totalorder %s237, %s238
      %p250 = scmp.eq.s32.totalorder %s29, 1
      %p251 = por %p249, %p250
      %p253 = scmp.ne.s32.totalorder %s238, %s252
      %p254 = scmp.eq.s32.totalorder %s29, 0
      %p255 = por %p253, %p254
      %s257 = sadd.s32 %s256, 1
      %p260 = scmp.eq.s32.totalorder %s23, 1
      %p261 = scmp.ne.s32.totalorder %s256, %s258
      %p262 = scmp.eq.s32.totalorder %s23, 0
      %p263 = por %p261, %p262
      %p264 = scmp.ne.s32.totalorder %s256, %s258
      %p265 = scmp.eq.s32.totalorder %s28, 1
      %p266 = por %p264, %p265
      %p267 = scmp.ne.s32.totalorder %s258, %s259
      %p268 = scmp.eq.s32.totalorder %s28, 0
      %p269 = por %p267, %p268
      %p270 = scmp.ne.s32.totalorder %s258, %s259
      %p271 = scmp.eq.s32.totalorder %s29, 1
      %p272 = por %p270, %p271
      %p274 = scmp.ne.s32.totalorder %s259, %s273
      %p275 = scmp.eq.s32.totalorder %s29, 0
      %p276 = por %p274, %p275
      %s278 = sadd.s32 %s277, 1
      %p281 = scmp.eq.s32.totalorder %s23, 1
      %p282 = scmp.ne.s32.totalorder %s277, %s279
      %p283 = scmp.eq.s32.totalorder %s23, 0
      %p284 = por %p282, %p283
      %p285 = scmp.ne.s32.totalorder %s277, %s279
      %p286 = scmp.eq.s32.totalorder %s28, 1
      %p287 = por %p285, %p286
      %p288 = scmp.ne.s32.totalorder %s279, %s280
      %p289 = scmp.eq.s32.totalorder %s28, 0
      %p290 = por %p288, %p289
      %p291 = scmp.ne.s32.totalorder %s279, %s280
      %p292 = scmp.eq.s32.totalorder %s29, 1
      %p293 = por %p291, %p292
      %p295 = scmp.ne.s32.totalorder %s280, %s294
      %p296 = scmp.eq.s32.totalorder %s29, 0
      %p297 = por %p295, %p296
      %s298 = ssub.s32 %s23, %s30
      %p299 = scmp.eq.s32.totalorder %s298, 0
      %s301 = sadd.s32 %s300, 1
      %s302 = scalar_select %p299, %s300, %s301
      %p305 = pneg %p299
      %p306 = scmp.eq.s32.totalorder %s23, 1
      %p307 = por %p305, %p306
      %p308 = scmp.ne.s32.totalorder %s300, %s303
      %p309 = scmp.eq.s32.totalorder %s23, 0
      %p310 = por %p308, %p309
      %p311 = scmp.ne.s32.totalorder %s300, %s303
      %p312 = scmp.eq.s32.totalorder %s28, 1
      %p313 = por %p311, %p312
      %p314 = scmp.ne.s32.totalorder %s303, %s304
      %p315 = scmp.eq.s32.totalorder %s28, 0
      %p316 = por %p314, %p315
      %p317 = scmp.ne.s32.totalorder %s303, %s304
      %p318 = scmp.eq.s32.totalorder %s29, 1
      %p319 = por %p317, %p318
      %p321 = scmp.ne.s32.totalorder %s304, %s320
      %p322 = scmp.eq.s32.totalorder %s29, 0
      %p323 = por %p321, %p322
      %p324 = scmp.le.s32.totalorder 1, %s23
      %p325 = scmp.lt.s32.totalorder %s23, 3
      %p326 = pnand %p324, %p325
      %p327 = pneg %p326
      // Predicated region
      $region9: #{tpu_custom_call.1} parent=5 // pred_check
        _
      $region10: #{tpu_custom_call.1} parent=5 // pred_check_branch
        %329 = sbr.rel (%p326) target = $region12
      $region11: #{tpu_custom_call.1} parent=5 // pred_region
        %s330 = ssub.s32 %s23, 1
        // Predicated region
        $region13: #{tpu_custom_call.1} parent=11 // pred_check
          %p331 = pneg %p122
        $region14: #{tpu_custom_call.1} parent=11 // pred_check_branch
          %333 = sbr.rel (%p331) target = $region16
        $region15: #{tpu_custom_call.1} parent=11 // pred_region
          %s335 = ssub.s32 18432, 18432
          %336 = vsyncadd [#allocation5], %s335
          %s337 = sshll.u32 [#allocation4], 4
          %s338 = int_to_ptr.vmem [resolvable:$true] %s337
          %343 = dma.hbm_to_vmem [thread:$0]  %s3, 18432, %s338, [#allocation5], 192, 192, 12
        $region16: #{tpu_custom_call.1} parent=11 // pred_fallthru
          _
        // Predicated region
        $region17: #{tpu_custom_call.1} parent=11 // pred_check
          %p344 = pneg %p143
        $region18: #{tpu_custom_call.1} parent=11 // pred_check_branch
          %346 = sbr.rel (%p344) target = $region20
        $region19: #{tpu_custom_call.1} parent=11 // pred_region
          _
        $region20: #{tpu_custom_call.1} parent=11 // pred_fallthru
          _
        // Predicated region
        $region21: #{tpu_custom_call.1} parent=11 // pred_check
          %p347 = pneg %p164
        $region22: #{tpu_custom_call.1} parent=11 // pred_check_branch
          %349 = sbr.rel (%p347) target = $region24
        $region23: #{tpu_custom_call.1} parent=11 // pred_region
          %s351 = ssub.s32 3072, 3072
          %352 = vsyncadd [#allocation5], %s351
          %s353 = sshll.u32 [#allocation6], 4
          %s354 = int_to_ptr.vmem [resolvable:$true] %s353
          %359 = dma.hbm_to_vmem [thread:$0]  %s5, 3072, %s354, [#allocation5], 64, 64, 4
        $region24: #{tpu_custom_call.1} parent=11 // pred_fallthru
          _
        // Predicated region
        $region25: #{tpu_custom_call.1} parent=11 // pred_check
          %p360 = pneg %p185
        $region26: #{tpu_custom_call.1} parent=11 // pred_check_branch
          %362 = sbr.rel (%p360) target = $region28
        $region27: #{tpu_custom_call.1} parent=11 // pred_region
          %s364 = ssub.s32 3072, 3072
          %365 = vsyncadd [#allocation8], %s364
          %s366 = sshll.u32 [#allocation7], 4
          %s367 = int_to_ptr.vmem [resolvable:$true] %s366
          %372 = dma.hbm_to_vmem [thread:$0]  %s6, 3072, %s367, [#allocation8], 64, 64, 4
        $region28: #{tpu_custom_call.1} parent=11 // pred_fallthru
          _
        // Predicated region
        $region29: #{tpu_custom_call.1} parent=11 // pred_check
          %p373 = pneg %p206
        $region30: #{tpu_custom_call.1} parent=11 // pred_check_branch
          %375 = sbr.rel (%p373) target = $region32
        $region31: #{tpu_custom_call.1} parent=11 // pred_region
          _
        $region32: #{tpu_custom_call.1} parent=11 // pred_fallthru
          _
        // Predicated region
        $region33: #{tpu_custom_call.1} parent=11 // pred_check
          %p376 = pneg %p227
        $region34: #{tpu_custom_call.1} parent=11 // pred_check_branch
          %378 = sbr.rel (%p376) target = $region36
        $region35: #{tpu_custom_call.1} parent=11 // pred_region
          %s380 = ssub.s32 1024, 1024
          %381 = vsyncadd [#allocation8], %s380
          %s382 = sshll.u32 [#allocation9], 4
          %s383 = int_to_ptr.vmem [resolvable:$true] %s382
          %388 = dma.hbm_to_vmem [thread:$0]  %s8, 1024, %s383, [#allocation8], 64, 64, 4
        $region36: #{tpu_custom_call.1} parent=11 // pred_fallthru
          _
        // Predicated region
        $region37: #{tpu_custom_call.1} parent=11 // pred_check
          %p389 = pneg %p248
        $region38: #{tpu_custom_call.1} parent=11 // pred_check_branch
          %391 = sbr.rel (%p389) target = $region40
        $region39: #{tpu_custom_call.1} parent=11 // pred_region
          _
        $region40: #{tpu_custom_call.1} parent=11 // pred_fallthru
          _
        // Predicated region
        $region41: #{tpu_custom_call.1} parent=11 // pred_check
          %p392 = pneg %p269
        $region42: #{tpu_custom_call.1} parent=11 // pred_check_branch
          %394 = sbr.rel (%p392) target = $region44
        $region43: #{tpu_custom_call.1} parent=11 // pred_region
          _
        $region44: #{tpu_custom_call.1} parent=11 // pred_fallthru
          _
        // Predicated region
        $region45: #{tpu_custom_call.1} parent=11 // pred_check
          %p395 = pneg %p290
        $region46: #{tpu_custom_call.1} parent=11 // pred_check_branch
          %397 = sbr.rel (%p395) target = $region48
        $region47: #{tpu_custom_call.1} parent=11 // pred_region
          _
        $region48: #{tpu_custom_call.1} parent=11 // pred_fallthru
          _
      $region12: #{tpu_custom_call.1} parent=5 // pred_fallthru
        _
      %p398 = scmp.lt.s32.totalorder %s23, 2
      // Predicated region
      $region49: #{tpu_custom_call.1} parent=5 // pred_check
        %p399 = pneg %p398
      $region50: #{tpu_custom_call.1} parent=5 // pred_check_branch
        %401 = sbr.rel (%p399) target = $region52
      $region51: #{tpu_custom_call.1} parent=5 // pred_region
        // Predicated region
        $region53: #{tpu_custom_call.1} parent=51 // pred_check
          %p402 = pneg %p43
        $region54: #{tpu_custom_call.1} parent=51 // pred_check_branch
          %404 = sbr.rel (%p402) target = $region56
        $region55: #{tpu_custom_call.1} parent=51 // pred_region
          %s405 = smul.u32 2, %s23
          %p406 = scmp.lt.s32.totalorder %s405, 3
          %s407 = scalar_select %p406, %s405, 3
          %s408 = smul.addr %s407, 8
          %s409 = scalar_lea.vmem %s0, %s408
          %s410 = smul.u32 2, %s23
        $region56: #{tpu_custom_call.1} parent=51 // pred_fallthru
          _
        // Predicated region
        $region57: #{tpu_custom_call.1} parent=51 // pred_check
          %p411 = pneg %p69
        $region58: #{tpu_custom_call.1} parent=51 // pred_check_branch
          %413 = sbr.rel (%p411) target = $region60
        $region59: #{tpu_custom_call.1} parent=51 // pred_region
          %s414 = smul.u32 2, %s23
          %p415 = scmp.lt.s32.totalorder %s414, 3
          %s416 = scalar_select %p415, %s414, 3
          %s417 = smul.addr %s416, 6
          %s418 = smul.addr %s417, 4
          %s419 = scalar_lea.vmem %s1, %s418
          %s420 = smul.u32 2, %s23
        $region60: #{tpu_custom_call.1} parent=51 // pred_fallthru
          _
        // Predicated region
        $region61: #{tpu_custom_call.1} parent=51 // pred_check
          %p421 = pneg %p95
        $region62: #{tpu_custom_call.1} parent=51 // pred_check_branch
          %423 = sbr.rel (%p421) target = $region64
        $region63: #{tpu_custom_call.1} parent=51 // pred_region
          %s424 = sand.u32 %s85, 1
          %s425 = scalar_lea.sflag [#allocation3], %s424
          %s426 = sand.u32 %s85, 1
          %s427 = smul.addr %s426, 48
          %s428 = scalar_lea.vmem [#allocation2], %s427
          %s429 = smul.u32 2, %s23
          %s431 = ssub.s32 768, 768
          %432 = vsyncadd %s425, %s431
          %s433 = smul.addr %s429, 6
          %s434 = smul.addr %s433, 64
          %s435 = scalar_lea.hbm %s2, %s434
          %s436 = sshll.u32 %s428, 4
          %s437 = int_to_ptr.vmem [resolvable:$true] %s436
          %442 = dma.hbm_to_vmem [thread:$0]  %s435, 768, %s437, %s425, 384, 384, 24
        $region64: #{tpu_custom_call.1} parent=51 // pred_fallthru
          _
      $region52: #{tpu_custom_call.1} parent=5 // pred_fallthru
        _
      %p443 = scmp.le.s32.totalorder 1, %s23
      %p444 = scmp.lt.s32.totalorder %s23, 3
      %p445 = pnand %p443, %p444
      %p446 = pneg %p445
      // Predicated region
      $region65: #{tpu_custom_call.1} parent=5 // pred_check
        _
      $region66: #{tpu_custom_call.1} parent=5 // pred_check_branch
        %448 = sbr.rel (%p445) target = $region68
      $region67: #{tpu_custom_call.1} parent=5 // pred_region
        %s449 = ssub.s32 %s23, 1
        %s450 = sand.u32 %s88, 1
        %s451 = scalar_lea.sflag [#allocation3], %s450
        %s452 = sand.u32 %s88, 1
        %s453 = smul.addr %s452, 48
        %s454 = scalar_lea.vmem [#allocation2], %s453
        // Predicated region
        $region69: #{tpu_custom_call.1} parent=67 // pred_check
          %p455 = pneg %p101
        $region70: #{tpu_custom_call.1} parent=67 // pred_check_branch
          %457 = sbr.rel (%p455) target = $region72
        $region71: #{tpu_custom_call.1} parent=67 // pred_region
          %458 = dma.done %s451, 768
        $region72: #{tpu_custom_call.1} parent=67 // pred_fallthru
          _
        // Predicated region
        $region73: #{tpu_custom_call.1} parent=67 // pred_check
          %p459 = pneg %p122
        $region74: #{tpu_custom_call.1} parent=67 // pred_check_branch
          %461 = sbr.rel (%p459) target = $region76
        $region75: #{tpu_custom_call.1} parent=67 // pred_region
          %462 = dma.done [#allocation5], 18432
        $region76: #{tpu_custom_call.1} parent=67 // pred_fallthru
          _
        // Predicated region
        $region77: #{tpu_custom_call.1} parent=67 // pred_check
          %p463 = pneg %p164
        $region78: #{tpu_custom_call.1} parent=67 // pred_check_branch
          %465 = sbr.rel (%p463) target = $region80
        $region79: #{tpu_custom_call.1} parent=67 // pred_region
          %466 = dma.done [#allocation5], 3072
        $region80: #{tpu_custom_call.1} parent=67 // pred_fallthru
          _
        // Predicated region
        $region81: #{tpu_custom_call.1} parent=67 // pred_check
          %p467 = pneg %p185
        $region82: #{tpu_custom_call.1} parent=67 // pred_check_branch
          %469 = sbr.rel (%p467) target = $region84
        $region83: #{tpu_custom_call.1} parent=67 // pred_region
          %470 = dma.done [#allocation8], 3072
        $region84: #{tpu_custom_call.1} parent=67 // pred_fallthru
          _
        // Predicated region
        $region85: #{tpu_custom_call.1} parent=67 // pred_check
          %p471 = pneg %p227
        $region86: #{tpu_custom_call.1} parent=67 // pred_check_branch
          %473 = sbr.rel (%p471) target = $region88
        $region87: #{tpu_custom_call.1} parent=67 // pred_region
          %474 = dma.done [#allocation8], 1024
        $region88: #{tpu_custom_call.1} parent=67 // pred_fallthru
          _
        %s475 = smul.u32 2, %s28
        %p476 = scmp.lt.s32.totalorder %s475, 3
        %s477 = scalar_select %p476, %s475, 3
        %s478 = smul.addr %s477, 8
        %s479 = scalar_lea.vmem %s0, %s478
        %p480 = pneg %p49
        %p481 = pneg %p46
        %s482 = smul.u32 2, %s28
        %p483 = scmp.lt.s32.totalorder %s482, 3
        %s484 = scalar_select %p483, %s482, 3
        %s485 = smul.addr %s484, 6
        %s486 = smul.addr %s485, 4
        %s487 = scalar_lea.vmem %s1, %s486
        %p488 = pneg %p75
        %p489 = pneg %p72
        %s490 = sand.u32 %s88, 1
        %s491 = scalar_lea.sflag [#allocation3], %s490
        %s492 = sand.u32 %s88, 1
        %s493 = smul.addr %s492, 48
        %s494 = scalar_lea.vmem [#allocation2], %s493
        %p495 = pneg %p101
        %p496 = pneg %p98
        %p497 = pneg %p122
        %p498 = pneg %p119
        %p499 = pneg %p143
        %p500 = pneg %p140
        %p501 = pneg %p164
        %p502 = pneg %p161
        %p503 = pneg %p185
        %p504 = pneg %p182
        %p505 = pneg %p206
        %p506 = pneg %p203
        %p507 = pneg %p227
        %p508 = pneg %p224
        %p509 = pneg %p248
        %p510 = pneg %p245
        %p511 = pneg %p269
        %p512 = pneg %p266
        %p513 = pneg %p290
        %p514 = pneg %p287
        %p515 = pneg %p316
        %p516 = pneg %p313
        %s517 = smul.u32 2, %s28
        %p518 = scmp.lt.s32.totalorder %s517, 3
        %s519 = scalar_select %p518, %s517, 3
        %s520 = smul.addr %s519, 8
        %s521 = scalar_lea.vmem %s12, %s520
        %s522 = smul.u32 2, %s28
        %p523 = scmp.lt.s32.totalorder %s522, 3
        %s524 = scalar_select %p523, %s522, 3
        %s525 = smul.addr %s524, 8
        %s526 = scalar_lea.vmem %s0, %s525
        %s527 = smul.u32 2, %s28
        %s528 = smul.u32 2, %s28
        %p529 = scmp.lt.s32.totalorder %s528, 3
        %s530 = scalar_select %p529, %s528, 3
        %s531 = smul.addr %s530, 6
        %s532 = smul.addr %s531, 4
        %s533 = scalar_lea.vmem %s1, %s532
        %s534 = smul.u32 2, %s28
        %s535 = smul.u32 2, %s28
        %s536 = smul.u32 2, %s28
        %p537 = scmp.lt.s32.totalorder %s536, 3
        %s538 = scalar_select %p537, %s536, 3
        %s539 = smul.addr %s538, 8
        %s540 = scalar_lea.vmem %s12, %s539
        %s541 = smul.u32 2, %s28
        %v543 = vld [vmem:[#allocation4] sm:$0xff]
        %v544 = vld [vmem:[#allocation4 + $0x8] sm:$0xf]
        %v545 = vld [vmem:[#allocation4 + $0xc] sm:$0xff]
        %v546 = vld [vmem:[#allocation4 + $0x14] sm:$0xf]
        %v547 = vld [vmem:[#allocation4 + $0x18] sm:$0xff]
        %v548 = vld [vmem:[#allocation4 + $0x20] sm:$0xf]
        %v549 = vld [vmem:[#allocation4 + $0x24] sm:$0xff]
        %v550 = vld [vmem:[#allocation4 + $0x2c] sm:$0xf]
        %v551 = vld [vmem:[#allocation4 + $0x30] sm:$0xff]
        %v552 = vld [vmem:[#allocation4 + $0x38] sm:$0xf]
        %v553 = vld [vmem:[#allocation4 + $0x3c] sm:$0xff]
        %v554 = vld [vmem:[#allocation4 + $0x44] sm:$0xf]
        %v555 = vld [vmem:[#allocation4 + $0x48] sm:$0xff]
        %v556 = vld [vmem:[#allocation4 + $0x50] sm:$0xf]
        %v557 = vld [vmem:[#allocation4 + $0x54] sm:$0xff]
        %v558 = vld [vmem:[#allocation4 + $0x5c] sm:$0xf]
        %v559 = vld [vmem:[#allocation4 + $0x60] sm:$0xff]
        %v560 = vld [vmem:[#allocation4 + $0x68] sm:$0xf]
        %v561 = vld [vmem:[#allocation4 + $0x6c] sm:$0xff]
        %v562 = vld [vmem:[#allocation4 + $0x74] sm:$0xf]
        %v563 = vld [vmem:[#allocation4 + $0x78] sm:$0xff]
        %v564 = vld [vmem:[#allocation4 + $0x80] sm:$0xf]
        %v565 = vld [vmem:[#allocation4 + $0x84] sm:$0xff]
        %v566 = vld [vmem:[#allocation4 + $0x8c] sm:$0xf]
        %v567 = vld [vmem:[#allocation4 + $0x90] sm:$0xff]
        %v568 = vld [vmem:[#allocation4 + $0x98] sm:$0xf]
        %v569 = vld [vmem:[#allocation4 + $0x9c] sm:$0xff]
        %v570 = vld [vmem:[#allocation4 + $0xa4] sm:$0xf]
        %v571 = vld [vmem:[#allocation4 + $0xa8] sm:$0xff]
        %v572 = vld [vmem:[#allocation4 + $0xb0] sm:$0xf]
        %v573 = vld [vmem:[#allocation4 + $0xb4] sm:$0xff]
        %v574 = vld [vmem:[#allocation4 + $0xbc] sm:$0xf]
        %v575 = vld [vmem:[#allocation4 + $0xc0] sm:$0xff]
        %v576 = vld [vmem:[#allocation4 + $0xc8] sm:$0xf]
        %v577 = vld [vmem:[#allocation4 + $0xcc] sm:$0xff]
        %v578 = vld [vmem:[#allocation4 + $0xd4] sm:$0xf]
        %v579 = vld [vmem:[#allocation4 + $0xd8] sm:$0xff]
        %v580 = vld [vmem:[#allocation4 + $0xe0] sm:$0xf]
        %v581 = vld [vmem:[#allocation4 + $0xe4] sm:$0xff]
        %v582 = vld [vmem:[#allocation4 + $0xec] sm:$0xf]
        %v583 = vld [vmem:[#allocation4 + $0xf0] sm:$0xff]
        %v584 = vld [vmem:[#allocation4 + $0xf8] sm:$0xf]
        %v585 = vld [vmem:[#allocation4 + $0xfc] sm:$0xff]
        %v586 = vld [vmem:[#allocation4 + $0x104] sm:$0xf]
        %v587 = vld [vmem:[#allocation4 + $0x108] sm:$0xff]
        %v588 = vld [vmem:[#allocation4 + $0x110] sm:$0xf]
        %v589 = vld [vmem:[#allocation4 + $0x114] sm:$0xff]
        %v590 = vld [vmem:[#allocation4 + $0x11c] sm:$0xf]
        %v591 = vld [vmem:[#allocation4 + $0x120] sm:$0xff]
        %v592 = vld [vmem:[#allocation4 + $0x128] sm:$0xf]
        %v593 = vld [vmem:[#allocation4 + $0x12c] sm:$0xff]
        %v594 = vld [vmem:[#allocation4 + $0x134] sm:$0xf]
        %v595 = vld [vmem:[#allocation4 + $0x138] sm:$0xff]
        %v596 = vld [vmem:[#allocation4 + $0x140] sm:$0xf]
        %v597 = vld [vmem:[#allocation4 + $0x144] sm:$0xff]
        %v598 = vld [vmem:[#allocation4 + $0x14c] sm:$0xf]
        %v599 = vld [vmem:[#allocation4 + $0x150] sm:$0xff]
        %v600 = vld [vmem:[#allocation4 + $0x158] sm:$0xf]
        %v601 = vld [vmem:[#allocation4 + $0x15c] sm:$0xff]
        %v602 = vld [vmem:[#allocation4 + $0x164] sm:$0xf]
        %v603 = vld [vmem:[#allocation4 + $0x168] sm:$0xff]
        %v604 = vld [vmem:[#allocation4 + $0x170] sm:$0xf]
        %v605 = vld [vmem:[#allocation4 + $0x174] sm:$0xff]
        %v606 = vld [vmem:[#allocation4 + $0x17c] sm:$0xf]
        %v607 = vld [vmem:[#allocation4 + $0x180] sm:$0xff]
        %v608 = vld [vmem:[#allocation4 + $0x188] sm:$0xf]
        %v609 = vld [vmem:[#allocation4 + $0x18c] sm:$0xff]
        %v610 = vld [vmem:[#allocation4 + $0x194] sm:$0xf]
        %v611 = vld [vmem:[#allocation4 + $0x198] sm:$0xff]
        %v612 = vld [vmem:[#allocation4 + $0x1a0] sm:$0xf]
        %v613 = vld [vmem:[#allocation4 + $0x1a4] sm:$0xff]
        %v614 = vld [vmem:[#allocation4 + $0x1ac] sm:$0xf]
        %v615 = vld [vmem:[#allocation4 + $0x1b0] sm:$0xff]
        %v616 = vld [vmem:[#allocation4 + $0x1b8] sm:$0xf]
        %v617 = vld [vmem:[#allocation4 + $0x1bc] sm:$0xff]
        %v618 = vld [vmem:[#allocation4 + $0x1c4] sm:$0xf]
        %v619 = vld [vmem:[#allocation4 + $0x1c8] sm:$0xff]
        %v620 = vld [vmem:[#allocation4 + $0x1d0] sm:$0xf]
        %v621 = vld [vmem:[#allocation4 + $0x1d4] sm:$0xff]
        %v622 = vld [vmem:[#allocation4 + $0x1dc] sm:$0xf]
        %v623 = vld [vmem:[#allocation4 + $0x1e0] sm:$0xff]
        %v624 = vld [vmem:[#allocation4 + $0x1e8] sm:$0xf]
        %v625 = vld [vmem:[#allocation4 + $0x1ec] sm:$0xff]
        %v626 = vld [vmem:[#allocation4 + $0x1f4] sm:$0xf]
        %v627 = vld [vmem:[#allocation4 + $0x1f8] sm:$0xff]
        %v628 = vld [vmem:[#allocation4 + $0x200] sm:$0xf]
        %v629 = vld [vmem:[#allocation4 + $0x204] sm:$0xff]
        %v630 = vld [vmem:[#allocation4 + $0x20c] sm:$0xf]
        %v631 = vld [vmem:[#allocation4 + $0x210] sm:$0xff]
        %v632 = vld [vmem:[#allocation4 + $0x218] sm:$0xf]
        %v633 = vld [vmem:[#allocation4 + $0x21c] sm:$0xff]
        %v634 = vld [vmem:[#allocation4 + $0x224] sm:$0xf]
        %v635 = vld [vmem:[#allocation4 + $0x228] sm:$0xff]
        %v636 = vld [vmem:[#allocation4 + $0x230] sm:$0xf]
        %v637 = vld [vmem:[#allocation4 + $0x234] sm:$0xff]
        %v638 = vld [vmem:[#allocation4 + $0x23c] sm:$0xf]
        %v639 = vld [vmem:[#allocation4 + $0x240] sm:$0xff]
        %v640 = vld [vmem:[#allocation4 + $0x248] sm:$0xf]
        %v641 = vld [vmem:[#allocation4 + $0x24c] sm:$0xff]
        %v642 = vld [vmem:[#allocation4 + $0x254] sm:$0xf]
        %v643 = vld [vmem:[#allocation4 + $0x258] sm:$0xff]
        %v644 = vld [vmem:[#allocation4 + $0x260] sm:$0xf]
        %v645 = vld [vmem:[#allocation4 + $0x264] sm:$0xff]
        %v646 = vld [vmem:[#allocation4 + $0x26c] sm:$0xf]
        %v647 = vld [vmem:[#allocation4 + $0x270] sm:$0xff]
        %v648 = vld [vmem:[#allocation4 + $0x278] sm:$0xf]
        %v649 = vld [vmem:[#allocation4 + $0x27c] sm:$0xff]
        %v650 = vld [vmem:[#allocation4 + $0x284] sm:$0xf]
        %v651 = vld [vmem:[#allocation4 + $0x288] sm:$0xff]
        %v652 = vld [vmem:[#allocation4 + $0x290] sm:$0xf]
        %v653 = vld [vmem:[#allocation4 + $0x294] sm:$0xff]
        %v654 = vld [vmem:[#allocation4 + $0x29c] sm:$0xf]
        %v655 = vld [vmem:[#allocation4 + $0x2a0] sm:$0xff]
        %v656 = vld [vmem:[#allocation4 + $0x2a8] sm:$0xf]
        %v657 = vld [vmem:[#allocation4 + $0x2ac] sm:$0xff]
        %v658 = vld [vmem:[#allocation4 + $0x2b4] sm:$0xf]
        %v659 = vld [vmem:[#allocation4 + $0x2b8] sm:$0xff]
        %v660 = vld [vmem:[#allocation4 + $0x2c0] sm:$0xf]
        %v661 = vld [vmem:[#allocation4 + $0x2c4] sm:$0xff]
        %v662 = vld [vmem:[#allocation4 + $0x2cc] sm:$0xf]
        %v663 = vld [vmem:[#allocation4 + $0x2d0] sm:$0xff]
        %v664 = vld [vmem:[#allocation4 + $0x2d8] sm:$0xf]
        %v665 = vld [vmem:[#allocation4 + $0x2dc] sm:$0xff]
        %v666 = vld [vmem:[#allocation4 + $0x2e4] sm:$0xf]
        %v667 = vld [vmem:[#allocation4 + $0x2e8] sm:$0xff]
        %v668 = vld [vmem:[#allocation4 + $0x2f0] sm:$0xf]
        %v669 = vld [vmem:[#allocation4 + $0x2f4] sm:$0xff]
        %v670 = vld [vmem:[#allocation4 + $0x2fc] sm:$0xf]
        %v671 = vld [vmem:[#allocation4 + $0x300] sm:$0xff]
        %v672 = vld [vmem:[#allocation4 + $0x308] sm:$0xf]
        %v673 = vld [vmem:[#allocation4 + $0x30c] sm:$0xff]
        %v674 = vld [vmem:[#allocation4 + $0x314] sm:$0xf]
        %v675 = vld [vmem:[#allocation4 + $0x318] sm:$0xff]
        %v676 = vld [vmem:[#allocation4 + $0x320] sm:$0xf]
        %v677 = vld [vmem:[#allocation4 + $0x324] sm:$0xff]
        %v678 = vld [vmem:[#allocation4 + $0x32c] sm:$0xf]
        %v679 = vld [vmem:[#allocation4 + $0x330] sm:$0xff]
        %v680 = vld [vmem:[#allocation4 + $0x338] sm:$0xf]
        %v681 = vld [vmem:[#allocation4 + $0x33c] sm:$0xff]
        %v682 = vld [vmem:[#allocation4 + $0x344] sm:$0xf]
        %v683 = vld [vmem:[#allocation4 + $0x348] sm:$0xff]
        %v684 = vld [vmem:[#allocation4 + $0x350] sm:$0xf]
        %v685 = vld [vmem:[#allocation4 + $0x354] sm:$0xff]
        %v686 = vld [vmem:[#allocation4 + $0x35c] sm:$0xf]
        %v687 = vld [vmem:[#allocation4 + $0x360] sm:$0xff]
        %v688 = vld [vmem:[#allocation4 + $0x368] sm:$0xf]
        %v689 = vld [vmem:[#allocation4 + $0x36c] sm:$0xff]
        %v690 = vld [vmem:[#allocation4 + $0x374] sm:$0xf]
        %v691 = vld [vmem:[#allocation4 + $0x378] sm:$0xff]
        %v692 = vld [vmem:[#allocation4 + $0x380] sm:$0xf]
        %v693 = vld [vmem:[#allocation4 + $0x384] sm:$0xff]
        %v694 = vld [vmem:[#allocation4 + $0x38c] sm:$0xf]
        %v695 = vld [vmem:[#allocation4 + $0x390] sm:$0xff]
        %v696 = vld [vmem:[#allocation4 + $0x398] sm:$0xf]
        %v697 = vld [vmem:[#allocation4 + $0x39c] sm:$0xff]
        %v698 = vld [vmem:[#allocation4 + $0x3a4] sm:$0xf]
        %v699 = vld [vmem:[#allocation4 + $0x3a8] sm:$0xff]
        %v700 = vld [vmem:[#allocation4 + $0x3b0] sm:$0xf]
        %v701 = vld [vmem:[#allocation4 + $0x3b4] sm:$0xff]
        %v702 = vld [vmem:[#allocation4 + $0x3bc] sm:$0xf]
        %v703 = vld [vmem:[#allocation4 + $0x3c0] sm:$0xff]
        %v704 = vld [vmem:[#allocation4 + $0x3c8] sm:$0xf]
        %v705 = vld [vmem:[#allocation4 + $0x3cc] sm:$0xff]
        %v706 = vld [vmem:[#allocation4 + $0x3d4] sm:$0xf]
        %v707 = vld [vmem:[#allocation4 + $0x3d8] sm:$0xff]
        %v708 = vld [vmem:[#allocation4 + $0x3e0] sm:$0xf]
        %v709 = vld [vmem:[#allocation4 + $0x3e4] sm:$0xff]
        %v710 = vld [vmem:[#allocation4 + $0x3ec] sm:$0xf]
        %v711 = vld [vmem:[#allocation4 + $0x3f0] sm:$0xff]
        %v712 = vld [vmem:[#allocation4 + $0x3f8] sm:$0xf]
        %v713 = vld [vmem:[#allocation4 + $0x3fc] sm:$0xff]
        %v714 = vld [vmem:[#allocation4 + $0x404] sm:$0xf]
        %v715 = vld [vmem:[#allocation4 + $0x408] sm:$0xff]
        %v716 = vld [vmem:[#allocation4 + $0x410] sm:$0xf]
        %v717 = vld [vmem:[#allocation4 + $0x414] sm:$0xff]
        %v718 = vld [vmem:[#allocation4 + $0x41c] sm:$0xf]
        %v719 = vld [vmem:[#allocation4 + $0x420] sm:$0xff]
        %v720 = vld [vmem:[#allocation4 + $0x428] sm:$0xf]
        %v721 = vld [vmem:[#allocation4 + $0x42c] sm:$0xff]
        %v722 = vld [vmem:[#allocation4 + $0x434] sm:$0xf]
        %v723 = vld [vmem:[#allocation4 + $0x438] sm:$0xff]
        %v724 = vld [vmem:[#allocation4 + $0x440] sm:$0xf]
        %v725 = vld [vmem:[#allocation4 + $0x444] sm:$0xff]
        %v726 = vld [vmem:[#allocation4 + $0x44c] sm:$0xf]
        %v727 = vld [vmem:[#allocation4 + $0x450] sm:$0xff]
        %v728 = vld [vmem:[#allocation4 + $0x458] sm:$0xf]
        %v729 = vld [vmem:[#allocation4 + $0x45c] sm:$0xff]
        %v730 = vld [vmem:[#allocation4 + $0x464] sm:$0xf]
        %v731 = vld [vmem:[#allocation4 + $0x468] sm:$0xff]
        %v732 = vld [vmem:[#allocation4 + $0x470] sm:$0xf]
        %v733 = vld [vmem:[#allocation4 + $0x474] sm:$0xff]
        %v734 = vld [vmem:[#allocation4 + $0x47c] sm:$0xf]
        %v735 = vld [vmem:[%s4] sm:$0x7]
        %v736 = vld [vmem:[%s533] sm:$0xff]
        %v737 = vld [vmem:[%s533 + $0x8] sm:$0xff]
        %v738 = vld [vmem:[%s533 + $0x10] sm:$0xff]
        %v739 = vld [vmem:[%s533 + $0x18] sm:$0xff]
        %v740 = vld [vmem:[%s533 + $0x20] sm:$0xff]
        %v741 = vld [vmem:[%s533 + $0x28] sm:$0xff]
        %v743 = vlaneseq
        %v744 = vshrl.u32 %v743, 7
        %v745 = vsub.s32 0, %v744
        %v746 = vrot.slane %v735, %v745
        %v747 = vlaneseq
        %v748 = vshrl.u32 %v747, 7
        %v749 = vsub.s32 1, %v748
        %v750 = vrot.slane %v735, %v749
        %v751 = vlaneseq
        %v752 = vshrl.u32 %v751, 7
        %v753 = vsub.s32 2, %v752
        %v754 = vrot.slane %v735, %v753
        %v764 = vunpack.c.l.b16 %v736
        %v765 = vunpack.c.h.b16 %v736
        %v766 = vunpack.c.l.b16 %v737
        %v767 = vunpack.c.h.b16 %v737
        %v768 = vunpack.c.l.b16 %v738
        %v769 = vunpack.c.h.b16 %v738
        %v770 = vunpack.c.l.b16 %v739
        %v771 = vunpack.c.h.b16 %v739
        %v772 = vunpack.c.l.b16 %v740
        %v773 = vunpack.c.h.b16 %v740
        %v774 = vunpack.c.l.b16 %v741
        %v775 = vunpack.c.h.b16 %v741
        %v776 = vpack.c.b16 %v770, %v764
        %v777 = vpack.c.b16 %v771, %v765
        %v778 = vpack.c.b16 %v772, %v766
        %v779 = vpack.c.b16 %v773, %v767
        %v780 = vpack.c.b16 %v774, %v768
        %v781 = vpack.c.b16 %v775, %v769
        %v980 = vunpack.c.l.b16 %v543
        %v981 = vunpack.c.h.b16 %v543
        %v982 = vunpack.c.l.b16 %v544
        %v983 = vunpack.c.l.b16 %v545
        %v984 = vunpack.c.h.b16 %v545
        %v985 = vunpack.c.l.b16 %v546
        %v986 = vunpack.c.l.b16 %v547
        %v987 = vunpack.c.h.b16 %v547
        %v988 = vunpack.c.l.b16 %v548
        %v989 = vunpack.c.l.b16 %v549
        %v990 = vunpack.c.h.b16 %v549
        %v991 = vunpack.c.l.b16 %v550
        %v992 = vunpack.c.l.b16 %v551
        %v993 = vunpack.c.h.b16 %v551
        %v994 = vunpack.c.l.b16 %v552
        %v995 = vunpack.c.l.b16 %v553
        %v996 = vunpack.c.h.b16 %v553
        %v997 = vunpack.c.l.b16 %v554
        %v998 = vunpack.c.l.b16 %v555
        %v999 = vunpack.c.h.b16 %v555
        %v1000 = vunpack.c.l.b16 %v556
        %v1001 = vunpack.c.l.b16 %v557
        %v1002 = vunpack.c.h.b16 %v557
        %v1003 = vunpack.c.l.b16 %v558
        %v1004 = vunpack.c.l.b16 %v559
        %v1005 = vunpack.c.h.b16 %v559
        %v1006 = vunpack.c.l.b16 %v560
        %v1007 = vunpack.c.l.b16 %v561
        %v1008 = vunpack.c.h.b16 %v561
        %v1009 = vunpack.c.l.b16 %v562
        %v1010 = vunpack.c.l.b16 %v563
        %v1011 = vunpack.c.h.b16 %v563
        %v1012 = vunpack.c.l.b16 %v564
        %v1013 = vunpack.c.l.b16 %v565
        %v1014 = vunpack.c.h.b16 %v565
        %v1015 = vunpack.c.l.b16 %v566
        %v1016 = vunpack.c.l.b16 %v567
        %v1017 = vunpack.c.h.b16 %v567
        %v1018 = vunpack.c.l.b16 %v568
        %v1019 = vunpack.c.l.b16 %v569
        %v1020 = vunpack.c.h.b16 %v569
        %v1021 = vunpack.c.l.b16 %v570
        %v1022 = vunpack.c.l.b16 %v571
        %v1023 = vunpack.c.h.b16 %v571
        %v1024 = vunpack.c.l.b16 %v572
        %v1025 = vunpack.c.l.b16 %v573
        %v1026 = vunpack.c.h.b16 %v573
        %v1027 = vunpack.c.l.b16 %v574
        %v1028 = vunpack.c.l.b16 %v575
        %v1029 = vunpack.c.h.b16 %v575
        %v1030 = vunpack.c.l.b16 %v576
        %v1031 = vunpack.c.l.b16 %v577
        %v1032 = vunpack.c.h.b16 %v577
        %v1033 = vunpack.c.l.b16 %v578
        %v1034 = vunpack.c.l.b16 %v579
        %v1035 = vunpack.c.h.b16 %v579
        %v1036 = vunpack.c.l.b16 %v580
        %v1037 = vunpack.c.l.b16 %v581
        %v1038 = vunpack.c.h.b16 %v581
        %v1039 = vunpack.c.l.b16 %v582
        %v1040 = vunpack.c.l.b16 %v583
        %v1041 = vunpack.c.h.b16 %v583
        %v1042 = vunpack.c.l.b16 %v584
        %v1043 = vunpack.c.l.b16 %v585
        %v1044 = vunpack.c.h.b16 %v585
        %v1045 = vunpack.c.l.b16 %v586
        %v1046 = vunpack.c.l.b16 %v587
        %v1047 = vunpack.c.h.b16 %v587
        %v1048 = vunpack.c.l.b16 %v588
        %v1049 = vunpack.c.l.b16 %v589
        %v1050 = vunpack.c.h.b16 %v589
        %v1051 = vunpack.c.l.b16 %v590
        %v1052 = vunpack.c.l.b16 %v591
        %v1053 = vunpack.c.h.b16 %v591
        %v1054 = vunpack.c.l.b16 %v592
        %v1055 = vunpack.c.l.b16 %v593
        %v1056 = vunpack.c.h.b16 %v593
        %v1057 = vunpack.c.l.b16 %v594
        %v1058 = vunpack.c.l.b16 %v595
        %v1059 = vunpack.c.h.b16 %v595
        %v1060 = vunpack.c.l.b16 %v596
        %v1061 = vunpack.c.l.b16 %v597
        %v1062 = vunpack.c.h.b16 %v597
        %v1063 = vunpack.c.l.b16 %v598
        %v1064 = vunpack.c.l.b16 %v599
        %v1065 = vunpack.c.h.b16 %v599
        %v1066 = vunpack.c.l.b16 %v600
        %v1067 = vunpack.c.l.b16 %v601
        %v1068 = vunpack.c.h.b16 %v601
        %v1069 = vunpack.c.l.b16 %v602
        %v1070 = vunpack.c.l.b16 %v603
        %v1071 = vunpack.c.h.b16 %v603
        %v1072 = vunpack.c.l.b16 %v604
        %v1073 = vunpack.c.l.b16 %v605
        %v1074 = vunpack.c.h.b16 %v605
        %v1075 = vunpack.c.l.b16 %v606
        %v1076 = vunpack.c.l.b16 %v607
        %v1077 = vunpack.c.h.b16 %v607
        %v1078 = vunpack.c.l.b16 %v608
        %v1079 = vunpack.c.l.b16 %v609
        %v1080 = vunpack.c.h.b16 %v609
        %v1081 = vunpack.c.l.b16 %v610
        %v1082 = vunpack.c.l.b16 %v611
        %v1083 = vunpack.c.h.b16 %v611
        %v1084 = vunpack.c.l.b16 %v612
        %v1085 = vunpack.c.l.b16 %v613
        %v1086 = vunpack.c.h.b16 %v613
        %v1087 = vunpack.c.l.b16 %v614
        %v1088 = vunpack.c.l.b16 %v615
        %v1089 = vunpack.c.h.b16 %v615
        %v1090 = vunpack.c.l.b16 %v616
        %v1091 = vunpack.c.l.b16 %v617
        %v1092 = vunpack.c.h.b16 %v617
        %v1093 = vunpack.c.l.b16 %v618
        %v1094 = vunpack.c.l.b16 %v619
        %v1095 = vunpack.c.h.b16 %v619
        %v1096 = vunpack.c.l.b16 %v620
        %v1097 = vunpack.c.l.b16 %v621
        %v1098 = vunpack.c.h.b16 %v621
        %v1099 = vunpack.c.l.b16 %v622
        %v1100 = vunpack.c.l.b16 %v623
        %v1101 = vunpack.c.h.b16 %v623
        %v1102 = vunpack.c.l.b16 %v624
        %v1103 = vunpack.c.l.b16 %v625
        %v1104 = vunpack.c.h.b16 %v625
        %v1105 = vunpack.c.l.b16 %v626
        %v1106 = vunpack.c.l.b16 %v627
        %v1107 = vunpack.c.h.b16 %v627
        %v1108 = vunpack.c.l.b16 %v628
        %v1109 = vunpack.c.l.b16 %v629
        %v1110 = vunpack.c.h.b16 %v629
        %v1111 = vunpack.c.l.b16 %v630
        %v1112 = vunpack.c.l.b16 %v631
        %v1113 = vunpack.c.h.b16 %v631
        %v1114 = vunpack.c.l.b16 %v632
        %v1115 = vunpack.c.l.b16 %v633
        %v1116 = vunpack.c.h.b16 %v633
        %v1117 = vunpack.c.l.b16 %v634
        %v1118 = vunpack.c.l.b16 %v635
        %v1119 = vunpack.c.h.b16 %v635
        %v1120 = vunpack.c.l.b16 %v636
        %v1121 = vunpack.c.l.b16 %v637
        %v1122 = vunpack.c.h.b16 %v637
        %v1123 = vunpack.c.l.b16 %v638
        %v1124 = vunpack.c.l.b16 %v639
        %v1125 = vunpack.c.h.b16 %v639
        %v1126 = vunpack.c.l.b16 %v640
        %v1127 = vunpack.c.l.b16 %v641
        %v1128 = vunpack.c.h.b16 %v641
        %v1129 = vunpack.c.l.b16 %v642
        %v1130 = vunpack.c.l.b16 %v643
        %v1131 = vunpack.c.h.b16 %v643
        %v1132 = vunpack.c.l.b16 %v644
        %v1133 = vunpack.c.l.b16 %v645
        %v1134 = vunpack.c.h.b16 %v645
        %v1135 = vunpack.c.l.b16 %v646
        %v1136 = vunpack.c.l.b16 %v647
        %v1137 = vunpack.c.h.b16 %v647
        %v1138 = vunpack.c.l.b16 %v648
        %v1139 = vunpack.c.l.b16 %v649
        %v1140 = vunpack.c.h.b16 %v649
        %v1141 = vunpack.c.l.b16 %v650
        %v1142 = vunpack.c.l.b16 %v651
        %v1143 = vunpack.c.h.b16 %v651
        %v1144 = vunpack.c.l.b16 %v652
        %v1145 = vunpack.c.l.b16 %v653
        %v1146 = vunpack.c.h.b16 %v653
        %v1147 = vunpack.c.l.b16 %v654
        %v1148 = vunpack.c.l.b16 %v655
        %v1149 = vunpack.c.h.b16 %v655
        %v1150 = vunpack.c.l.b16 %v656
        %v1151 = vunpack.c.l.b16 %v657
        %v1152 = vunpack.c.h.b16 %v657
        %v1153 = vunpack.c.l.b16 %v658
        %v1154 = vunpack.c.l.b16 %v659
        %v1155 = vunpack.c.h.b16 %v659
        %v1156 = vunpack.c.l.b16 %v660
        %v1157 = vunpack.c.l.b16 %v661
        %v1158 = vunpack.c.h.b16 %v661
        %v1159 = vunpack.c.l.b16 %v662
        %v1160 = vunpack.c.l.b16 %v663
        %v1161 = vunpack.c.h.b16 %v663
        %v1162 = vunpack.c.l.b16 %v664
        %v1163 = vunpack.c.l.b16 %v665
        %v1164 = vunpack.c.h.b16 %v665
        %v1165 = vunpack.c.l.b16 %v666
        %v1166 = vunpack.c.l.b16 %v667
        %v1167 = vunpack.c.h.b16 %v667
        %v1168 = vunpack.c.l.b16 %v668
        %v1169 = vunpack.c.l.b16 %v669
        %v1170 = vunpack.c.h.b16 %v669
        %v1171 = vunpack.c.l.b16 %v670
        %v1172 = vunpack.c.l.b16 %v671
        %v1173 = vunpack.c.h.b16 %v671
        %v1174 = vunpack.c.l.b16 %v672
        %v1175 = vunpack.c.l.b16 %v673
        %v1176 = vunpack.c.h.b16 %v673
        %v1177 = vunpack.c.l.b16 %v674
        %v1178 = vunpack.c.l.b16 %v675
        %v1179 = vunpack.c.h.b16 %v675
        %v1180 = vunpack.c.l.b16 %v676
        %v1181 = vunpack.c.l.b16 %v677
        %v1182 = vunpack.c.h.b16 %v677
        %v1183 = vunpack.c.l.b16 %v678
        %v1184 = vunpack.c.l.b16 %v679
        %v1185 = vunpack.c.h.b16 %v679
        %v1186 = vunpack.c.l.b16 %v680
        %v1187 = vunpack.c.l.b16 %v681
        %v1188 = vunpack.c.h.b16 %v681
        %v1189 = vunpack.c.l.b16 %v682
        %v1190 = vunpack.c.l.b16 %v683
        %v1191 = vunpack.c.h.b16 %v683
        %v1192 = vunpack.c.l.b16 %v684
        %v1193 = vunpack.c.l.b16 %v685
        %v1194 = vunpack.c.h.b16 %v685
        %v1195 = vunpack.c.l.b16 %v686
        %v1196 = vunpack.c.l.b16 %v687
        %v1197 = vunpack.c.h.b16 %v687
        %v1198 = vunpack.c.l.b16 %v688
        %v1199 = vunpack.c.l.b16 %v689
        %v1200 = vunpack.c.h.b16 %v689
        %v1201 = vunpack.c.l.b16 %v690
        %v1202 = vunpack.c.l.b16 %v691
        %v1203 = vunpack.c.h.b16 %v691
        %v1204 = vunpack.c.l.b16 %v692
        %v1205 = vunpack.c.l.b16 %v693
        %v1206 = vunpack.c.h.b16 %v693
        %v1207 = vunpack.c.l.b16 %v694
        %v1208 = vunpack.c.l.b16 %v695
        %v1209 = vunpack.c.h.b16 %v695
        %v1210 = vunpack.c.l.b16 %v696
        %v1211 = vunpack.c.l.b16 %v697
        %v1212 = vunpack.c.h.b16 %v697
        %v1213 = vunpack.c.l.b16 %v698
        %v1214 = vunpack.c.l.b16 %v699
        %v1215 = vunpack.c.h.b16 %v699
        %v1216 = vunpack.c.l.b16 %v700
        %v1217 = vunpack.c.l.b16 %v701
        %v1218 = vunpack.c.h.b16 %v701
        %v1219 = vunpack.c.l.b16 %v702
        %v1220 = vunpack.c.l.b16 %v703
        %v1221 = vunpack.c.h.b16 %v703
        %v1222 = vunpack.c.l.b16 %v704
        %v1223 = vunpack.c.l.b16 %v705
        %v1224 = vunpack.c.h.b16 %v705
        %v1225 = vunpack.c.l.b16 %v706
        %v1226 = vunpack.c.l.b16 %v707
        %v1227 = vunpack.c.h.b16 %v707
        %v1228 = vunpack.c.l.b16 %v708
        %v1229 = vunpack.c.l.b16 %v709
        %v1230 = vunpack.c.h.b16 %v709
        %v1231 = vunpack.c.l.b16 %v710
        %v1232 = vunpack.c.l.b16 %v711
        %v1233 = vunpack.c.h.b16 %v711
        %v1234 = vunpack.c.l.b16 %v712
        %v1235 = vunpack.c.l.b16 %v713
        %v1236 = vunpack.c.h.b16 %v713
        %v1237 = vunpack.c.l.b16 %v714
        %v1238 = vunpack.c.l.b16 %v715
        %v1239 = vunpack.c.h.b16 %v715
        %v1240 = vunpack.c.l.b16 %v716
        %v1241 = vunpack.c.l.b16 %v717
        %v1242 = vunpack.c.h.b16 %v717
        %v1243 = vunpack.c.l.b16 %v718
        %v1244 = vunpack.c.l.b16 %v719
        %v1245 = vunpack.c.h.b16 %v719
        %v1246 = vunpack.c.l.b16 %v720
        %v1247 = vunpack.c.l.b16 %v721
        %v1248 = vunpack.c.h.b16 %v721
        %v1249 = vunpack.c.l.b16 %v722
        %v1250 = vunpack.c.l.b16 %v723
        %v1251 = vunpack.c.h.b16 %v723
        %v1252 = vunpack.c.l.b16 %v724
        %v1253 = vunpack.c.l.b16 %v725
        %v1254 = vunpack.c.h.b16 %v725
        %v1255 = vunpack.c.l.b16 %v726
        %v1256 = vunpack.c.l.b16 %v727
        %v1257 = vunpack.c.h.b16 %v727
        %v1258 = vunpack.c.l.b16 %v728
        %v1259 = vunpack.c.l.b16 %v729
        %v1260 = vunpack.c.h.b16 %v729
        %v1261 = vunpack.c.l.b16 %v730
        %v1262 = vunpack.c.l.b16 %v731
        %v1263 = vunpack.c.h.b16 %v731
        %v1264 = vunpack.c.l.b16 %v732
        %v1265 = vunpack.c.l.b16 %v733
        %v1266 = vunpack.c.h.b16 %v733
        %v1267 = vunpack.c.l.b16 %v734
        %v1268 = vpack.c.b16 %v983, %v980
        %v1269 = vpack.c.b16 %v984, %v981
        %v1270 = vpack.c.b16 %v985, %v982
        %v1271 = vpack.c.b16 %v989, %v986
        %v1272 = vpack.c.b16 %v990, %v987
        %v1273 = vpack.c.b16 %v991, %v988
        %v1274 = vpack.c.b16 %v995, %v992
        %v1275 = vpack.c.b16 %v996, %v993
        %v1276 = vpack.c.b16 %v997, %v994
        %v1277 = vpack.c.b16 %v1001, %v998
        %v1278 = vpack.c.b16 %v1002, %v999
        %v1279 = vpack.c.b16 %v1003, %v1000
        %v1280 = vpack.c.b16 %v1007, %v1004
        %v1281 = vpack.c.b16 %v1008, %v1005
        %v1282 = vpack.c.b16 %v1009, %v1006
        %v1283 = vpack.c.b16 %v1013, %v1010
        %v1284 = vpack.c.b16 %v1014, %v1011
        %v1285 = vpack.c.b16 %v1015, %v1012
        %v1286 = vpack.c.b16 %v1019, %v1016
        %v1287 = vpack.c.b16 %v1020, %v1017
        %v1288 = vpack.c.b16 %v1021, %v1018
        %v1289 = vpack.c.b16 %v1025, %v1022
        %v1290 = vpack.c.b16 %v1026, %v1023
        %v1291 = vpack.c.b16 %v1027, %v1024
        %v1292 = vpack.c.b16 %v1031, %v1028
        %v1293 = vpack.c.b16 %v1032, %v1029
        %v1294 = vpack.c.b16 %v1033, %v1030
        %v1295 = vpack.c.b16 %v1037, %v1034
        %v1296 = vpack.c.b16 %v1038, %v1035
        %v1297 = vpack.c.b16 %v1039, %v1036
        %v1298 = vpack.c.b16 %v1043, %v1040
        %v1299 = vpack.c.b16 %v1044, %v1041
        %v1300 = vpack.c.b16 %v1045, %v1042
        %v1301 = vpack.c.b16 %v1049, %v1046
        %v1302 = vpack.c.b16 %v1050, %v1047
        %v1303 = vpack.c.b16 %v1051, %v1048
        %v1304 = vpack.c.b16 %v1055, %v1052
        %v1305 = vpack.c.b16 %v1056, %v1053
        %v1306 = vpack.c.b16 %v1057, %v1054
        %v1307 = vpack.c.b16 %v1061, %v1058
        %v1308 = vpack.c.b16 %v1062, %v1059
        %v1309 = vpack.c.b16 %v1063, %v1060
        %v1310 = vpack.c.b16 %v1067, %v1064
        %v1311 = vpack.c.b16 %v1068, %v1065
        %v1312 = vpack.c.b16 %v1069, %v1066
        %v1313 = vpack.c.b16 %v1073, %v1070
        %v1314 = vpack.c.b16 %v1074, %v1071
        %v1315 = vpack.c.b16 %v1075, %v1072
        %v1316 = vpack.c.b16 %v1079, %v1076
        %v1317 = vpack.c.b16 %v1080, %v1077
        %v1318 = vpack.c.b16 %v1081, %v1078
        %v1319 = vpack.c.b16 %v1085, %v1082
        %v1320 = vpack.c.b16 %v1086, %v1083
        %v1321 = vpack.c.b16 %v1087, %v1084
        %v1322 = vpack.c.b16 %v1091, %v1088
        %v1323 = vpack.c.b16 %v1092, %v1089
        %v1324 = vpack.c.b16 %v1093, %v1090
        %v1325 = vpack.c.b16 %v1097, %v1094
        %v1326 = vpack.c.b16 %v1098, %v1095
        %v1327 = vpack.c.b16 %v1099, %v1096
        %v1328 = vpack.c.b16 %v1103, %v1100
        %v1329 = vpack.c.b16 %v1104, %v1101
        %v1330 = vpack.c.b16 %v1105, %v1102
        %v1331 = vpack.c.b16 %v1109, %v1106
        %v1332 = vpack.c.b16 %v1110, %v1107
        %v1333 = vpack.c.b16 %v1111, %v1108
        %v1334 = vpack.c.b16 %v1115, %v1112
        %v1335 = vpack.c.b16 %v1116, %v1113
        %v1336 = vpack.c.b16 %v1117, %v1114
        %v1337 = vpack.c.b16 %v1121, %v1118
        %v1338 = vpack.c.b16 %v1122, %v1119
        %v1339 = vpack.c.b16 %v1123, %v1120
        %v1340 = vpack.c.b16 %v1127, %v1124
        %v1341 = vpack.c.b16 %v1128, %v1125
        %v1342 = vpack.c.b16 %v1129, %v1126
        %v1343 = vpack.c.b16 %v1133, %v1130
        %v1344 = vpack.c.b16 %v1134, %v1131
        %v1345 = vpack.c.b16 %v1135, %v1132
        %v1346 = vpack.c.b16 %v1139, %v1136
        %v1347 = vpack.c.b16 %v1140, %v1137
        %v1348 = vpack.c.b16 %v1141, %v1138
        %v1349 = vpack.c.b16 %v1145, %v1142
        %v1350 = vpack.c.b16 %v1146, %v1143
        %v1351 = vpack.c.b16 %v1147, %v1144
        %v1352 = vpack.c.b16 %v1151, %v1148
        %v1353 = vpack.c.b16 %v1152, %v1149
        %v1354 = vpack.c.b16 %v1153, %v1150
        %v1355 = vpack.c.b16 %v1157, %v1154
        %v1356 = vpack.c.b16 %v1158, %v1155
        %v1357 = vpack.c.b16 %v1159, %v1156
        %v1358 = vpack.c.b16 %v1163, %v1160
        %v1359 = vpack.c.b16 %v1164, %v1161
        %v1360 = vpack.c.b16 %v1165, %v1162
        %v1361 = vpack.c.b16 %v1169, %v1166
        %v1362 = vpack.c.b16 %v1170, %v1167
        %v1363 = vpack.c.b16 %v1171, %v1168
        %v1364 = vpack.c.b16 %v1175, %v1172
        %v1365 = vpack.c.b16 %v1176, %v1173
        %v1366 = vpack.c.b16 %v1177, %v1174
        %v1367 = vpack.c.b16 %v1181, %v1178
        %v1368 = vpack.c.b16 %v1182, %v1179
        %v1369 = vpack.c.b16 %v1183, %v1180
        %v1370 = vpack.c.b16 %v1187, %v1184
        %v1371 = vpack.c.b16 %v1188, %v1185
        %v1372 = vpack.c.b16 %v1189, %v1186
        %v1373 = vpack.c.b16 %v1193, %v1190
        %v1374 = vpack.c.b16 %v1194, %v1191
        %v1375 = vpack.c.b16 %v1195, %v1192
        %v1376 = vpack.c.b16 %v1199, %v1196
        %v1377 = vpack.c.b16 %v1200, %v1197
        %v1378 = vpack.c.b16 %v1201, %v1198
        %v1379 = vpack.c.b16 %v1205, %v1202
        %v1380 = vpack.c.b16 %v1206, %v1203
        %v1381 = vpack.c.b16 %v1207, %v1204
        %v1382 = vpack.c.b16 %v1211, %v1208
        %v1383 = vpack.c.b16 %v1212, %v1209
        %v1384 = vpack.c.b16 %v1213, %v1210
        %v1385 = vpack.c.b16 %v1217, %v1214
        %v1386 = vpack.c.b16 %v1218, %v1215
        %v1387 = vpack.c.b16 %v1219, %v1216
        %v1388 = vpack.c.b16 %v1223, %v1220
        %v1389 = vpack.c.b16 %v1224, %v1221
        %v1390 = vpack.c.b16 %v1225, %v1222
        %v1391 = vpack.c.b16 %v1229, %v1226
        %v1392 = vpack.c.b16 %v1230, %v1227
        %v1393 = vpack.c.b16 %v1231, %v1228
        %v1394 = vpack.c.b16 %v1235, %v1232
        %v1395 = vpack.c.b16 %v1236, %v1233
        %v1396 = vpack.c.b16 %v1237, %v1234
        %v1397 = vpack.c.b16 %v1241, %v1238
        %v1398 = vpack.c.b16 %v1242, %v1239
        %v1399 = vpack.c.b16 %v1243, %v1240
        %v1400 = vpack.c.b16 %v1247, %v1244
        %v1401 = vpack.c.b16 %v1248, %v1245
        %v1402 = vpack.c.b16 %v1249, %v1246
        %v1403 = vpack.c.b16 %v1253, %v1250
        %v1404 = vpack.c.b16 %v1254, %v1251
        %v1405 = vpack.c.b16 %v1255, %v1252
        %v1406 = vpack.c.b16 %v1259, %v1256
        %v1407 = vpack.c.b16 %v1260, %v1257
        %v1408 = vpack.c.b16 %v1261, %v1258
        %v1409 = vpack.c.b16 %v1265, %v1262
        %v1410 = vpack.c.b16 %v1266, %v1263
        %v1411 = vpack.c.b16 %v1267, %v1264
        %1556 = vmatprep.subr.bf16.mxu0 %v1269
        %1557 = vmatpush1.bf16.msra.mxu0 %v1268
        %1558 = vmatprep.subr.bf16.mxu0 %v1272
        %1559 = vmatpush1.bf16.msra.mxu0 %v1271
        %1560 = vmatprep.subr.bf16.mxu0 %v1275
        %1561 = vmatpush1.bf16.msra.mxu0 %v1274
        %1562 = vmatprep.subr.bf16.mxu0 %v1278
        %1563 = vmatpush1.bf16.msra.mxu0 %v1277
        %1564 = vmatprep.subr.bf16.mxu0 %v1281
        %1565 = vmatpush1.bf16.msra.mxu0 %v1280
        %1566 = vmatprep.subr.bf16.mxu0 %v1284
        %1567 = vmatpush1.bf16.msra.mxu0 %v1283
        %1568 = vmatprep.subr.bf16.mxu0 %v1287
        %1569 = vmatpush1.bf16.msra.mxu0 %v1286
        %1570 = vmatprep.subr.bf16.mxu0 %v1290
        %1571 = vmatpush1.bf16.msra.mxu0 %v1289
        %1572 = vmatprep.subr.bf16.mxu0 %v1293
        %1573 = vmatpush1.bf16.msra.mxu0 %v1292
        %1574 = vmatprep.subr.bf16.mxu0 %v1296
        %1575 = vmatpush1.bf16.msra.mxu0 %v1295
        %1576 = vmatprep.subr.bf16.mxu0 %v1299
        %1577 = vmatpush1.bf16.msra.mxu0 %v1298
        %1578 = vmatprep.subr.bf16.mxu0 %v1302
        %1579 = vmatpush1.bf16.msra.mxu0 %v1301
        %1580 = vmatprep.subr.bf16.mxu0 %v1305
        %1581 = vmatpush1.bf16.msra.mxu0 %v1304
        %1582 = vmatprep.subr.bf16.mxu0 %v1308
        %1583 = vmatpush1.bf16.msra.mxu0 %v1307
        %1584 = vmatprep.subr.bf16.mxu0 %v1311
        %1585 = vmatpush1.bf16.msra.mxu0 %v1310
        %1586 = vmatprep.subr.bf16.mxu0 %v1314
        %1587 = vmatpush1.bf16.msra.mxu0 %v1313
        %1588 = vmatprep.mubr.bf16.mxu0 %v777
        %1589 = vmatmul.mubr.bf16.gmra.mrb[0].mxu0 %v776
        %v1590 = vpop.f32.mrb[0].mxu0
        %v1591 = vadd.f32 %v746, %v1590
        %v1592 = vpop.f32.mrb[0].mxu0
        %v1593 = vadd.f32 %v750, %v1592
        %v1594 = vpop.f32.mrb[0].mxu0
        %v1595 = vadd.f32 %v746, %v1594
        %v1596 = vpop.f32.mrb[0].mxu0
        %v1597 = vadd.f32 %v750, %v1596
        %1598 = vdwg.mxu0
        %1599 = vmatprep.subr.bf16.mxu0 %v1317
        %1600 = vmatpush1.bf16.msra.mxu0 %v1316
        %1601 = vmatprep.subr.bf16.mxu0 %v1320
        %1602 = vmatpush1.bf16.msra.mxu0 %v1319
        %1603 = vmatprep.subr.bf16.mxu0 %v1323
        %1604 = vmatpush1.bf16.msra.mxu0 %v1322
        %1605 = vmatprep.subr.bf16.mxu0 %v1326
        %1606 = vmatpush1.bf16.msra.mxu0 %v1325
        %1607 = vmatprep.subr.bf16.mxu0 %v1329
        %1608 = vmatpush1.bf16.msra.mxu0 %v1328
        %1609 = vmatprep.subr.bf16.mxu0 %v1332
        %1610 = vmatpush1.bf16.msra.mxu0 %v1331
        %1611 = vmatprep.subr.bf16.mxu0 %v1335
        %1612 = vmatpush1.bf16.msra.mxu0 %v1334
        %1613 = vmatprep.subr.bf16.mxu0 %v1338
        %1614 = vmatpush1.bf16.msra.mxu0 %v1337
        %1615 = vmatprep.subr.bf16.mxu0 %v1341
        %1616 = vmatpush1.bf16.msra.mxu0 %v1340
        %1617 = vmatprep.subr.bf16.mxu0 %v1344
        %1618 = vmatpush1.bf16.msra.mxu0 %v1343
        %1619 = vmatprep.subr.bf16.mxu0 %v1347
        %1620 = vmatpush1.bf16.msra.mxu0 %v1346
        %1621 = vmatprep.subr.bf16.mxu0 %v1350
        %1622 = vmatpush1.bf16.msra.mxu0 %v1349
        %1623 = vmatprep.subr.bf16.mxu0 %v1353
        %1624 = vmatpush1.bf16.msra.mxu0 %v1352
        %1625 = vmatprep.subr.bf16.mxu0 %v1356
        %1626 = vmatpush1.bf16.msra.mxu0 %v1355
        %1627 = vmatprep.subr.bf16.mxu0 %v1359
        %1628 = vmatpush1.bf16.msra.mxu0 %v1358
        %1629 = vmatprep.subr.bf16.mxu0 %v1362
        %1630 = vmatpush1.bf16.msra.mxu0 %v1361
        %1631 = vmatprep.mubr.bf16.mxu0 %v779
        %1632 = vmatmul.mubr.bf16.gmra.mrb[0].mxu0 %v778
        %v1633 = vpop.f32.mrb[0].mxu0
        %v1634 = vadd.f32 %v1591, %v1633
        %v1635 = vpop.f32.mrb[0].mxu0
        %v1636 = vadd.f32 %v1593, %v1635
        %v1637 = vpop.f32.mrb[0].mxu0
        %v1638 = vadd.f32 %v1595, %v1637
        %v1639 = vpop.f32.mrb[0].mxu0
        %v1640 = vadd.f32 %v1597, %v1639
        %1641 = vdwg.mxu0
        %1642 = vmatprep.subr.bf16.mxu0 %v1365
        %1643 = vmatpush1.bf16.msra.mxu0 %v1364
        %1644 = vmatprep.subr.bf16.mxu0 %v1368
        %1645 = vmatpush1.bf16.msra.mxu0 %v1367
        %1646 = vmatprep.subr.bf16.mxu0 %v1371
        %1647 = vmatpush1.bf16.msra.mxu0 %v1370
        %1648 = vmatprep.subr.bf16.mxu0 %v1374
        %1649 = vmatpush1.bf16.msra.mxu0 %v1373
        %1650 = vmatprep.subr.bf16.mxu0 %v1377
        %1651 = vmatpush1.bf16.msra.mxu0 %v1376
        %1652 = vmatprep.subr.bf16.mxu0 %v1380
        %1653 = vmatpush1.bf16.msra.mxu0 %v1379
        %1654 = vmatprep.subr.bf16.mxu0 %v1383
        %1655 = vmatpush1.bf16.msra.mxu0 %v1382
        %1656 = vmatprep.subr.bf16.mxu0 %v1386
        %1657 = vmatpush1.bf16.msra.mxu0 %v1385
        %1658 = vmatprep.subr.bf16.mxu0 %v1389
        %1659 = vmatpush1.bf16.msra.mxu0 %v1388
        %1660 = vmatprep.subr.bf16.mxu0 %v1392
        %1661 = vmatpush1.bf16.msra.mxu0 %v1391
        %1662 = vmatprep.subr.bf16.mxu0 %v1395
        %1663 = vmatpush1.bf16.msra.mxu0 %v1394
        %1664 = vmatprep.subr.bf16.mxu0 %v1398
        %1665 = vmatpush1.bf16.msra.mxu0 %v1397
        %1666 = vmatprep.subr.bf16.mxu0 %v1401
        %1667 = vmatpush1.bf16.msra.mxu0 %v1400
        %1668 = vmatprep.subr.bf16.mxu0 %v1404
        %1669 = vmatpush1.bf16.msra.mxu0 %v1403
        %1670 = vmatprep.subr.bf16.mxu0 %v1407
        %1671 = vmatpush1.bf16.msra.mxu0 %v1406
        %1672 = vmatprep.subr.bf16.mxu0 %v1410
        %1673 = vmatpush1.bf16.msra.mxu0 %v1409
        %1674 = vmatprep.mubr.bf16.mxu0 %v781
        %1675 = vmatmul.mubr.bf16.gmra.mrb[0].mxu0 %v780
        %v1676 = vpop.f32.mrb[0].mxu0
        %v1677 = vadd.f32 %v1634, %v1676
        %v1678 = vpop.f32.mrb[0].mxu0
        %v1679 = vadd.f32 %v1636, %v1678
        %v1680 = vpop.f32.mrb[0].mxu0
        %v1681 = vadd.f32 %v1638, %v1680
        %v1682 = vpop.f32.mrb[0].mxu0
        %v1683 = vadd.f32 %v1640, %v1682
        %1684 = vdwg.mxu0
        %1685 = vmatprep.subr.bf16.mxu0 0
        %1686 = vmatpush1.bf16.msra.mxu0 %v1270
        %1687 = vmatprep.subr.bf16.mxu0 0
        %1688 = vmatpush1.bf16.msra.mxu0 %v1273
        %1689 = vmatprep.subr.bf16.mxu0 0
        %1690 = vmatpush1.bf16.msra.mxu0 %v1276
        %1691 = vmatprep.subr.bf16.mxu0 0
        %1692 = vmatpush1.bf16.msra.mxu0 %v1279
        %1693 = vmatprep.subr.bf16.mxu0 0
        %1694 = vmatpush1.bf16.msra.mxu0 %v1282
        %1695 = vmatprep.subr.bf16.mxu0 0
        %1696 = vmatpush1.bf16.msra.mxu0 %v1285
        %1697 = vmatprep.subr.bf16.mxu0 0
        %1698 = vmatpush1.bf16.msra.mxu0 %v1288
        %1699 = vmatprep.subr.bf16.mxu0 0
        %1700 = vmatpush1.bf16.msra.mxu0 %v1291
        %1701 = vmatprep.subr.bf16.mxu0 0
        %1702 = vmatpush1.bf16.msra.mxu0 %v1294
        %1703 = vmatprep.subr.bf16.mxu0 0
        %1704 = vmatpush1.bf16.msra.mxu0 %v1297
        %1705 = vmatprep.subr.bf16.mxu0 0
        %1706 = vmatpush1.bf16.msra.mxu0 %v1300
        %1707 = vmatprep.subr.bf16.mxu0 0
        %1708 = vmatpush1.bf16.msra.mxu0 %v1303
        %1709 = vmatprep.subr.bf16.mxu0 0
        %1710 = vmatpush1.bf16.msra.mxu0 %v1306
        %1711 = vmatprep.subr.bf16.mxu0 0
        %1712 = vmatpush1.bf16.msra.mxu0 %v1309
        %1713 = vmatprep.subr.bf16.mxu0 0
        %1714 = vmatpush1.bf16.msra.mxu0 %v1312
        %1715 = vmatprep.subr.bf16.mxu0 0
        %1716 = vmatpush1.bf16.msra.mxu0 %v1315
        %1717 = vmatprep.mubr.bf16.mxu0 %v777
        %1718 = vmatmul.mubr.bf16.gmra.mrb[0].mxu0 %v776
        %v1719 = vpop.f32.mrb[0].mxu0
        %v1720 = vadd.f32 %v754, %v1719
        %v1721 = vpop.f32.mrb[0].mxu0
        %v1722 = vpop.f32.mrb[0].mxu0
        %v1723 = vadd.f32 %v754, %v1722
        %v1724 = vpop.f32.mrb[0].mxu0
        %1725 = vdwg.mxu0
        %1726 = vmatprep.subr.bf16.mxu0 0
        %1727 = vmatpush1.bf16.msra.mxu0 %v1318
        %1728 = vmatprep.subr.bf16.mxu0 0
        %1729 = vmatpush1.bf16.msra.mxu0 %v1321
        %1730 = vmatprep.subr.bf16.mxu0 0
        %1731 = vmatpush1.bf16.msra.mxu0 %v1324
        %1732 = vmatprep.subr.bf16.mxu0 0
        %1733 = vmatpush1.bf16.msra.mxu0 %v1327
        %1734 = vmatprep.subr.bf16.mxu0 0
        %1735 = vmatpush1.bf16.msra.mxu0 %v1330
        %1736 = vmatprep.subr.bf16.mxu0 0
        %1737 = vmatpush1.bf16.msra.mxu0 %v1333
        %1738 = vmatprep.subr.bf16.mxu0 0
        %1739 = vmatpush1.bf16.msra.mxu0 %v1336
        %1740 = vmatprep.subr.bf16.mxu0 0
        %1741 = vmatpush1.bf16.msra.mxu0 %v1339
        %1742 = vmatprep.subr.bf16.mxu0 0
        %1743 = vmatpush1.bf16.msra.mxu0 %v1342
        %1744 = vmatprep.subr.bf16.mxu0 0
        %1745 = vmatpush1.bf16.msra.mxu0 %v1345
        %1746 = vmatprep.subr.bf16.mxu0 0
        %1747 = vmatpush1.bf16.msra.mxu0 %v1348
        %1748 = vmatprep.subr.bf16.mxu0 0
        %1749 = vmatpush1.bf16.msra.mxu0 %v1351
        %1750 = vmatprep.subr.bf16.mxu0 0
        %1751 = vmatpush1.bf16.msra.mxu0 %v1354
        %1752 = vmatprep.subr.bf16.mxu0 0
        %1753 = vmatpush1.bf16.msra.mxu0 %v1357
        %1754 = vmatprep.subr.bf16.mxu0 0
        %1755 = vmatpush1.bf16.msra.mxu0 %v1360
        %1756 = vmatprep.subr.bf16.mxu0 0
        %1757 = vmatpush1.bf16.msra.mxu0 %v1363
        %1758 = vmatprep.mubr.bf16.mxu0 %v779
        %1759 = vmatmul.mubr.bf16.gmra.mrb[0].mxu0 %v778
        %v1760 = vpop.f32.mrb[0].mxu0
        %v1761 = vadd.f32 %v1720, %v1760
        %v1762 = vpop.f32.mrb[0].mxu0
        %v1763 = vpop.f32.mrb[0].mxu0
        %v1764 = vadd.f32 %v1723, %v1763
        %v1765 = vpop.f32.mrb[0].mxu0
        %1766 = vdwg.mxu0
        %1767 = vmatprep.subr.bf16.mxu0 0
        %1768 = vmatpush1.bf16.msra.mxu0 %v1366
        %1769 = vmatprep.subr.bf16.mxu0 0
        %1770 = vmatpush1.bf16.msra.mxu0 %v1369
        %1771 = vmatprep.subr.bf16.mxu0 0
        %1772 = vmatpush1.bf16.msra.mxu0 %v1372
        %1773 = vmatprep.subr.bf16.mxu0 0
        %1774 = vmatpush1.bf16.msra.mxu0 %v1375
        %1775 = vmatprep.subr.bf16.mxu0 0
        %1776 = vmatpush1.bf16.msra.mxu0 %v1378
        %1777 = vmatprep.subr.bf16.mxu0 0
        %1778 = vmatpush1.bf16.msra.mxu0 %v1381
        %1779 = vmatprep.subr.bf16.mxu0 0
        %1780 = vmatpush1.bf16.msra.mxu0 %v1384
        %1781 = vmatprep.subr.bf16.mxu0 0
        %1782 = vmatpush1.bf16.msra.mxu0 %v1387
        %1783 = vmatprep.subr.bf16.mxu0 0
        %1784 = vmatpush1.bf16.msra.mxu0 %v1390
        %1785 = vmatprep.subr.bf16.mxu0 0
        %1786 = vmatpush1.bf16.msra.mxu0 %v1393
        %1787 = vmatprep.subr.bf16.mxu0 0
        %1788 = vmatpush1.bf16.msra.mxu0 %v1396
        %1789 = vmatprep.subr.bf16.mxu0 0
        %1790 = vmatpush1.bf16.msra.mxu0 %v1399
        %1791 = vmatprep.subr.bf16.mxu0 0
        %1792 = vmatpush1.bf16.msra.mxu0 %v1402
        %1793 = vmatprep.subr.bf16.mxu0 0
        %1794 = vmatpush1.bf16.msra.mxu0 %v1405
        %1795 = vmatprep.subr.bf16.mxu0 0
        %1796 = vmatpush1.bf16.msra.mxu0 %v1408
        %1797 = vmatprep.subr.bf16.mxu0 0
        %1798 = vmatpush1.bf16.msra.mxu0 %v1411
        %1799 = vmatprep.mubr.bf16.mxu0 %v781
        %1800 = vmatmul.mubr.bf16.gmra.mrb[0].mxu0 %v780
        %v1801 = vpop.f32.mrb[0].mxu0
        %v1802 = vadd.f32 %v1761, %v1801
        %v1803 = vpop.f32.mrb[0].mxu0
        %v1804 = vpop.f32.mrb[0].mxu0
        %v1805 = vadd.f32 %v1764, %v1804
        %v1806 = vpop.f32.mrb[0].mxu0
        %1807 = vdwg.mxu0
        %v1808 = vld [vmem:[%s454] sm:$0xff]
        %v1809 = vld [vmem:[%s454 + $0x8] sm:$0xff]
        %v1810 = vld [vmem:[%s454 + $0x10] sm:$0xff]
        %v1811 = vld [vmem:[%s454 + $0x18] sm:$0xff]
        %v1812 = vld [vmem:[%s454 + $0x20] sm:$0xff]
        %v1813 = vld [vmem:[%s454 + $0x28] sm:$0xff]
        %v1820 = vunpack.c.l.b16 %v1808
        %v1821 = vunpack.c.h.b16 %v1808
        %v1822 = vunpack.c.l.b16 %v1809
        %v1823 = vunpack.c.h.b16 %v1809
        %v1824 = vunpack.c.l.b16 %v1810
        %v1825 = vunpack.c.h.b16 %v1810
        %v1826 = vunpack.c.l.b16 %v1811
        %v1827 = vunpack.c.h.b16 %v1811
        %v1828 = vunpack.c.l.b16 %v1812
        %v1829 = vunpack.c.h.b16 %v1812
        %v1830 = vunpack.c.l.b16 %v1813
        %v1831 = vunpack.c.h.b16 %v1813
        %v1832 = vpack.c.b16 %v1826, %v1820
        %v1833 = vpack.c.b16 %v1827, %v1821
        %v1834 = vpack.c.b16 %v1828, %v1822
        %v1835 = vpack.c.b16 %v1829, %v1823
        %v1836 = vpack.c.b16 %v1830, %v1824
        %v1837 = vpack.c.b16 %v1831, %v1825
        %1844 = vmatprep.subr.bf16.mxu0 %v1269
        %1845 = vmatpush1.bf16.msra.mxu0 %v1268
        %1846 = vmatprep.subr.bf16.mxu0 %v1272
        %1847 = vmatpush1.bf16.msra.mxu0 %v1271
        %1848 = vmatprep.subr.bf16.mxu0 %v1275
        %1849 = vmatpush1.bf16.msra.mxu0 %v1274
        %1850 = vmatprep.subr.bf16.mxu0 %v1278
        %1851 = vmatpush1.bf16.msra.mxu0 %v1277
        %1852 = vmatprep.subr.bf16.mxu0 %v1281
        %1853 = vmatpush1.bf16.msra.mxu0 %v1280
        %1854 = vmatprep.subr.bf16.mxu0 %v1284
        %1855 = vmatpush1.bf16.msra.mxu0 %v1283
        %1856 = vmatprep.subr.bf16.mxu0 %v1287
        %1857 = vmatpush1.bf16.msra.mxu0 %v1286
        %1858 = vmatprep.subr.bf16.mxu0 %v1290
        %1859 = vmatpush1.bf16.msra.mxu0 %v1289
        %1860 = vmatprep.subr.bf16.mxu0 %v1293
        %1861 = vmatpush1.bf16.msra.mxu0 %v1292
        %1862 = vmatprep.subr.bf16.mxu0 %v1296
        %1863 = vmatpush1.bf16.msra.mxu0 %v1295
        %1864 = vmatprep.subr.bf16.mxu0 %v1299
        %1865 = vmatpush1.bf16.msra.mxu0 %v1298
        %1866 = vmatprep.subr.bf16.mxu0 %v1302
        %1867 = vmatpush1.bf16.msra.mxu0 %v1301
        %1868 = vmatprep.subr.bf16.mxu0 %v1305
        %1869 = vmatpush1.bf16.msra.mxu0 %v1304
        %1870 = vmatprep.subr.bf16.mxu0 %v1308
        %1871 = vmatpush1.bf16.msra.mxu0 %v1307
        %1872 = vmatprep.subr.bf16.mxu0 %v1311
        %1873 = vmatpush1.bf16.msra.mxu0 %v1310
        %1874 = vmatprep.subr.bf16.mxu0 %v1314
        %1875 = vmatpush1.bf16.msra.mxu0 %v1313
        %1876 = vmatprep.mubr.bf16.mxu0 %v1833
        %1877 = vmatmul.mubr.bf16.gmra.mrb[0].mxu0 %v1832
        %v1878 = vpop.f32.mrb[0].mxu0
        %v1879 = vadd.f32 %v746, %v1878
        %v1880 = vpop.f32.mrb[0].mxu0
        %v1881 = vadd.f32 %v750, %v1880
        %v1882 = vpop.f32.mrb[0].mxu0
        %v1883 = vadd.f32 %v746, %v1882
        %v1884 = vpop.f32.mrb[0].mxu0
        %v1885 = vadd.f32 %v750, %v1884
        %1886 = vdwg.mxu0
        %1887 = vmatprep.subr.bf16.mxu0 %v1317
        %1888 = vmatpush1.bf16.msra.mxu0 %v1316
        %1889 = vmatprep.subr.bf16.mxu0 %v1320
        %1890 = vmatpush1.bf16.msra.mxu0 %v1319
        %1891 = vmatprep.subr.bf16.mxu0 %v1323
        %1892 = vmatpush1.bf16.msra.mxu0 %v1322
        %1893 = vmatprep.subr.bf16.mxu0 %v1326
        %1894 = vmatpush1.bf16.msra.mxu0 %v1325
        %1895 = vmatprep.subr.bf16.mxu0 %v1329
        %1896 = vmatpush1.bf16.msra.mxu0 %v1328
        %1897 = vmatprep.subr.bf16.mxu0 %v1332
        %1898 = vmatpush1.bf16.msra.mxu0 %v1331
        %1899 = vmatprep.subr.bf16.mxu0 %v1335
        %1900 = vmatpush1.bf16.msra.mxu0 %v1334
        %1901 = vmatprep.subr.bf16.mxu0 %v1338
        %1902 = vmatpush1.bf16.msra.mxu0 %v1337
        %1903 = vmatprep.subr.bf16.mxu0 %v1341
        %1904 = vmatpush1.bf16.msra.mxu0 %v1340
        %1905 = vmatprep.subr.bf16.mxu0 %v1344
        %1906 = vmatpush1.bf16.msra.mxu0 %v1343
        %1907 = vmatprep.subr.bf16.mxu0 %v1347
        %1908 = vmatpush1.bf16.msra.mxu0 %v1346
        %1909 = vmatprep.subr.bf16.mxu0 %v1350
        %1910 = vmatpush1.bf16.msra.mxu0 %v1349
        %1911 = vmatprep.subr.bf16.mxu0 %v1353
        %1912 = vmatpush1.bf16.msra.mxu0 %v1352
        %1913 = vmatprep.subr.bf16.mxu0 %v1356
        %1914 = vmatpush1.bf16.msra.mxu0 %v1355
        %1915 = vmatprep.subr.bf16.mxu0 %v1359
        %1916 = vmatpush1.bf16.msra.mxu0 %v1358
        %1917 = vmatprep.subr.bf16.mxu0 %v1362
        %1918 = vmatpush1.bf16.msra.mxu0 %v1361
        %1919 = vmatprep.mubr.bf16.mxu0 %v1835
        %1920 = vmatmul.mubr.bf16.gmra.mrb[0].mxu0 %v1834
        %v1921 = vpop.f32.mrb[0].mxu0
        %v1922 = vadd.f32 %v1879, %v1921
        %v1923 = vpop.f32.mrb[0].mxu0
        %v1924 = vadd.f32 %v1881, %v1923
        %v1925 = vpop.f32.mrb[0].mxu0
        %v1926 = vadd.f32 %v1883, %v1925
        %v1927 = vpop.f32.mrb[0].mxu0
        %v1928 = vadd.f32 %v1885, %v1927
        %1929 = vdwg.mxu0
        %1930 = vmatprep.subr.bf16.mxu0 %v1365
        %1931 = vmatpush1.bf16.msra.mxu0 %v1364
        %1932 = vmatprep.subr.bf16.mxu0 %v1368
        %1933 = vmatpush1.bf16.msra.mxu0 %v1367
        %1934 = vmatprep.subr.bf16.mxu0 %v1371
        %1935 = vmatpush1.bf16.msra.mxu0 %v1370
        %1936 = vmatprep.subr.bf16.mxu0 %v1374
        %1937 = vmatpush1.bf16.msra.mxu0 %v1373
        %1938 = vmatprep.subr.bf16.mxu0 %v1377
        %1939 = vmatpush1.bf16.msra.mxu0 %v1376
        %1940 = vmatprep.subr.bf16.mxu0 %v1380
        %1941 = vmatpush1.bf16.msra.mxu0 %v1379
        %1942 = vmatprep.subr.bf16.mxu0 %v1383
        %1943 = vmatpush1.bf16.msra.mxu0 %v1382
        %1944 = vmatprep.subr.bf16.mxu0 %v1386
        %1945 = vmatpush1.bf16.msra.mxu0 %v1385
        %1946 = vmatprep.subr.bf16.mxu0 %v1389
        %1947 = vmatpush1.bf16.msra.mxu0 %v1388
        %1948 = vmatprep.subr.bf16.mxu0 %v1392
        %1949 = vmatpush1.bf16.msra.mxu0 %v1391
        %1950 = vmatprep.subr.bf16.mxu0 %v1395
        %1951 = vmatpush1.bf16.msra.mxu0 %v1394
        %1952 = vmatprep.subr.bf16.mxu0 %v1398
        %1953 = vmatpush1.bf16.msra.mxu0 %v1397
        %1954 = vmatprep.subr.bf16.mxu0 %v1401
        %1955 = vmatpush1.bf16.msra.mxu0 %v1400
        %1956 = vmatprep.subr.bf16.mxu0 %v1404
        %1957 = vmatpush1.bf16.msra.mxu0 %v1403
        %1958 = vmatprep.subr.bf16.mxu0 %v1407
        %1959 = vmatpush1.bf16.msra.mxu0 %v1406
        %1960 = vmatprep.subr.bf16.mxu0 %v1410
        %1961 = vmatpush1.bf16.msra.mxu0 %v1409
        %1962 = vmatprep.mubr.bf16.mxu0 %v1837
        %1963 = vmatmul.mubr.bf16.gmra.mrb[0].mxu0 %v1836
        %v1964 = vpop.f32.mrb[0].mxu0
        %v1965 = vadd.f32 %v1922, %v1964
        %v1966 = vpop.f32.mrb[0].mxu0
        %v1967 = vadd.f32 %v1924, %v1966
        %v1968 = vpop.f32.mrb[0].mxu0
        %v1969 = vadd.f32 %v1926, %v1968
        %v1970 = vpop.f32.mrb[0].mxu0
        %v1971 = vadd.f32 %v1928, %v1970
        %1972 = vdwg.mxu0
        %1973 = vmatprep.subr.bf16.mxu0 0
        %1974 = vmatpush1.bf16.msra.mxu0 %v1270
        %1975 = vmatprep.subr.bf16.mxu0 0
        %1976 = vmatpush1.bf16.msra.mxu0 %v1273
        %1977 = vmatprep.subr.bf16.mxu0 0
        %1978 = vmatpush1.bf16.msra.mxu0 %v1276
        %1979 = vmatprep.subr.bf16.mxu0 0
        %1980 = vmatpush1.bf16.msra.mxu0 %v1279
        %1981 = vmatprep.subr.bf16.mxu0 0
        %1982 = vmatpush1.bf16.msra.mxu0 %v1282
        %1983 = vmatprep.subr.bf16.mxu0 0
        %1984 = vmatpush1.bf16.msra.mxu0 %v1285
        %1985 = vmatprep.subr.bf16.mxu0 0
        %1986 = vmatpush1.bf16.msra.mxu0 %v1288
        %1987 = vmatprep.subr.bf16.mxu0 0
        %1988 = vmatpush1.bf16.msra.mxu0 %v1291
        %1989 = vmatprep.subr.bf16.mxu0 0
        %1990 = vmatpush1.bf16.msra.mxu0 %v1294
        %1991 = vmatprep.subr.bf16.mxu0 0
        %1992 = vmatpush1.bf16.msra.mxu0 %v1297
        %1993 = vmatprep.subr.bf16.mxu0 0
        %1994 = vmatpush1.bf16.msra.mxu0 %v1300
        %1995 = vmatprep.subr.bf16.mxu0 0
        %1996 = vmatpush1.bf16.msra.mxu0 %v1303
        %1997 = vmatprep.subr.bf16.mxu0 0
        %1998 = vmatpush1.bf16.msra.mxu0 %v1306
        %1999 = vmatprep.subr.bf16.mxu0 0
        %2000 = vmatpush1.bf16.msra.mxu0 %v1309
        %2001 = vmatprep.subr.bf16.mxu0 0
        %2002 = vmatpush1.bf16.msra.mxu0 %v1312
        %2003 = vmatprep.subr.bf16.mxu0 0
        %2004 = vmatpush1.bf16.msra.mxu0 %v1315
        %2005 = vmatprep.mubr.bf16.mxu0 %v1833
        %2006 = vmatmul.mubr.bf16.gmra.mrb[0].mxu0 %v1832
        %v2007 = vpop.f32.mrb[0].mxu0
        %v2008 = vadd.f32 %v754, %v2007
        %v2009 = vpop.f32.mrb[0].mxu0
        %v2010 = vpop.f32.mrb[0].mxu0
        %v2011 = vadd.f32 %v754, %v2010
        %v2012 = vpop.f32.mrb[0].mxu0
        %2013 = vdwg.mxu0
        %2014 = vmatprep.subr.bf16.mxu0 0
        %2015 = vmatpush1.bf16.msra.mxu0 %v1318
        %2016 = vmatprep.subr.bf16.mxu0 0
        %2017 = vmatpush1.bf16.msra.mxu0 %v1321
        %2018 = vmatprep.subr.bf16.mxu0 0
        %2019 = vmatpush1.bf16.msra.mxu0 %v1324
        %2020 = vmatprep.subr.bf16.mxu0 0
        %2021 = vmatpush1.bf16.msra.mxu0 %v1327
        %2022 = vmatprep.subr.bf16.mxu0 0
        %2023 = vmatpush1.bf16.msra.mxu0 %v1330
        %2024 = vmatprep.subr.bf16.mxu0 0
        %2025 = vmatpush1.bf16.msra.mxu0 %v1333
        %2026 = vmatprep.subr.bf16.mxu0 0
        %2027 = vmatpush1.bf16.msra.mxu0 %v1336
        %2028 = vmatprep.subr.bf16.mxu0 0
        %2029 = vmatpush1.bf16.msra.mxu0 %v1339
        %2030 = vmatprep.subr.bf16.mxu0 0
        %2031 = vmatpush1.bf16.msra.mxu0 %v1342
        %2032 = vmatprep.subr.bf16.mxu0 0
        %2033 = vmatpush1.bf16.msra.mxu0 %v1345
        %2034 = vmatprep.subr.bf16.mxu0 0
        %2035 = vmatpush1.bf16.msra.mxu0 %v1348
        %2036 = vmatprep.subr.bf16.mxu0 0
        %2037 = vmatpush1.bf16.msra.mxu0 %v1351
        %2038 = vmatprep.subr.bf16.mxu0 0
        %2039 = vmatpush1.bf16.msra.mxu0 %v1354
        %2040 = vmatprep.subr.bf16.mxu0 0
        %2041 = vmatpush1.bf16.msra.mxu0 %v1357
        %2042 = vmatprep.subr.bf16.mxu0 0
        %2043 = vmatpush1.bf16.msra.mxu0 %v1360
        %2044 = vmatprep.subr.bf16.mxu0 0
        %2045 = vmatpush1.bf16.msra.mxu0 %v1363
        %2046 = vmatprep.mubr.bf16.mxu0 %v1835
        %2047 = vmatmul.mubr.bf16.gmra.mrb[0].mxu0 %v1834
        %v2048 = vpop.f32.mrb[0].mxu0
        %v2049 = vadd.f32 %v2008, %v2048
        %v2050 = vpop.f32.mrb[0].mxu0
        %v2051 = vpop.f32.mrb[0].mxu0
        %v2052 = vadd.f32 %v2011, %v2051
        %v2053 = vpop.f32.mrb[0].mxu0
        %2054 = vdwg.mxu0
        %2055 = vmatprep.subr.bf16.mxu0 0
        %2056 = vmatpush1.bf16.msra.mxu0 %v1366
        %2057 = vmatprep.subr.bf16.mxu0 0
        %2058 = vmatpush1.bf16.msra.mxu0 %v1369
        %2059 = vmatprep.subr.bf16.mxu0 0
        %2060 = vmatpush1.bf16.msra.mxu0 %v1372
        %2061 = vmatprep.subr.bf16.mxu0 0
        %2062 = vmatpush1.bf16.msra.mxu0 %v1375
        %2063 = vmatprep.subr.bf16.mxu0 0
        %2064 = vmatpush1.bf16.msra.mxu0 %v1378
        %2065 = vmatprep.subr.bf16.mxu0 0
        %2066 = vmatpush1.bf16.msra.mxu0 %v1381
        %2067 = vmatprep.subr.bf16.mxu0 0
        %2068 = vmatpush1.bf16.msra.mxu0 %v1384
        %2069 = vmatprep.subr.bf16.mxu0 0
        %2070 = vmatpush1.bf16.msra.mxu0 %v1387
        %2071 = vmatprep.subr.bf16.mxu0 0
        %2072 = vmatpush1.bf16.msra.mxu0 %v1390
        %2073 = vmatprep.subr.bf16.mxu0 0
        %2074 = vmatpush1.bf16.msra.mxu0 %v1393
        %2075 = vmatprep.subr.bf16.mxu0 0
        %2076 = vmatpush1.bf16.msra.mxu0 %v1396
        %2077 = vmatprep.subr.bf16.mxu0 0
        %2078 = vmatpush1.bf16.msra.mxu0 %v1399
        %2079 = vmatprep.subr.bf16.mxu0 0
        %2080 = vmatpush1.bf16.msra.mxu0 %v1402
        %2081 = vmatprep.subr.bf16.mxu0 0
        %2082 = vmatpush1.bf16.msra.mxu0 %v1405
        %2083 = vmatprep.subr.bf16.mxu0 0
        %2084 = vmatpush1.bf16.msra.mxu0 %v1408
        %2085 = vmatprep.subr.bf16.mxu0 0
        %2086 = vmatpush1.bf16.msra.mxu0 %v1411
        %2087 = vmatprep.mubr.bf16.mxu0 %v1837
        %2088 = vmatmul.mubr.bf16.gmra.mrb[0].mxu0 %v1836
        %v2089 = vpop.f32.mrb[0].mxu0
        %v2090 = vadd.f32 %v2049, %v2089
        %v2091 = vpop.f32.mrb[0].mxu0
        %v2092 = vpop.f32.mrb[0].mxu0
        %v2093 = vadd.f32 %v2052, %v2092
        %v2094 = vpop.f32.mrb[0].mxu0
        %2095 = vdwg.mxu0
        %v2096 = vld [vmem:[%s526] sm:$0xff]
        %v2097 = vld [vmem:[%s526 + $0x8] sm:$0xff]
        %2099 = vset.pattern.permute.xlu0 0
        %2100 = vperm.xlu0 %2099, %v2096
        %v2101 = vpop.permute.xlu0 %2100
        %2104 = vset.pattern.permute.xlu0 0
        %2105 = vperm.xlu0 %2104, %v2097
        %v2106 = vpop.permute.xlu0 %2105
        %2108 = vset.pattern.permute.xlu0 1
        %2109 = vperm.xlu0 %2108, %v2096
        %v2110 = vpop.permute.xlu0 %2109
        %2112 = vset.pattern.permute.xlu0 1
        %2113 = vperm.xlu0 %2112, %v2097
        %v2114 = vpop.permute.xlu0 %2113
        %v2116 = vmul.f32 %v2101, %v1677
        %v2117 = vmul.f32 %v2101, %v1679
        %v2118 = vmul.f32 %v2101, %v1802
        %v2119 = vmul.f32 %v2106, %v1681
        %v2120 = vmul.f32 %v2106, %v1683
        %v2121 = vmul.f32 %v2106, %v1805
        %v2122 = vmul.f32 %v2110, %v1965
        %v2123 = vmul.f32 %v2110, %v1967
        %v2124 = vmul.f32 %v2110, %v2090
        %v2125 = vmul.f32 %v2114, %v1969
        %v2126 = vmul.f32 %v2114, %v1971
        %v2127 = vmul.f32 %v2114, %v2093
        %v2128 = vadd.f32 %v2116, %v2122
        %v2129 = vadd.f32 %v2117, %v2123
        %v2130 = vadd.f32 %v2118, %v2124
        %v2131 = vadd.f32 %v2119, %v2125
        %v2132 = vadd.f32 %v2120, %v2126
        %v2133 = vadd.f32 %v2121, %v2127
        %v2134 = vmax.f32 %v2128, 0.0
        %v2135 = vmax.f32 %v2129, 0.0
        %v2136 = vmax.f32 %v2130, 0.0
        %v2137 = vmax.f32 %v2131, 0.0
        %v2138 = vmax.f32 %v2132, 0.0
        %v2139 = vmax.f32 %v2133, 0.0
        %v2140 = vmin.f32 %v2134, 1.0
        %v2141 = vmin.f32 %v2135, 1.0
        %v2142 = vmin.f32 %v2136, 1.0
        %v2143 = vmin.f32 %v2137, 1.0
        %v2144 = vmin.f32 %v2138, 1.0
        %v2145 = vmin.f32 %v2139, 1.0
        %v2146 = vpack.c.bf16 %v2143, %v2140
        %v2147 = vpack.c.bf16 %v2144, %v2141
        %v2148 = vpack.c.bf16 %v2145, %v2142
        %v2149 = vmul.f32 %v2101, %v1965
        %v2150 = vmul.f32 %v2101, %v1967
        %v2151 = vmul.f32 %v2101, %v2090
        %v2152 = vmul.f32 %v2106, %v1969
        %v2153 = vmul.f32 %v2106, %v1971
        %v2154 = vmul.f32 %v2106, %v2093
        %v2155 = vmul.f32 %v2110, %v1677
        %v2156 = vmul.f32 %v2110, %v1679
        %v2157 = vmul.f32 %v2110, %v1802
        %v2158 = vmul.f32 %v2114, %v1681
        %v2159 = vmul.f32 %v2114, %v1683
        %v2160 = vmul.f32 %v2114, %v1805
        %v2161 = vadd.f32 %v2149, %v2155
        %v2162 = vadd.f32 %v2150, %v2156
        %v2163 = vadd.f32 %v2151, %v2157
        %v2164 = vadd.f32 %v2152, %v2158
        %v2165 = vadd.f32 %v2153, %v2159
        %v2166 = vadd.f32 %v2154, %v2160
        %v2167 = vmax.f32 %v2161, 0.0
        %v2168 = vmax.f32 %v2162, 0.0
        %v2169 = vmax.f32 %v2163, 0.0
        %v2170 = vmax.f32 %v2164, 0.0
        %v2171 = vmax.f32 %v2165, 0.0
        %v2172 = vmax.f32 %v2166, 0.0
        %v2173 = vmin.f32 %v2167, 1.0
        %v2174 = vmin.f32 %v2168, 1.0
        %v2175 = vmin.f32 %v2169, 1.0
        %v2176 = vmin.f32 %v2170, 1.0
        %v2177 = vmin.f32 %v2171, 1.0
        %v2178 = vmin.f32 %v2172, 1.0
        %v2179 = vpack.c.bf16 %v2176, %v2173
        %v2180 = vpack.c.bf16 %v2177, %v2174
        %v2181 = vpack.c.bf16 %v2178, %v2175
        %v2182 = vld [vmem:[#allocation6] sm:$0xf]
        %v2183 = vld [vmem:[#allocation6 + $0x4] sm:$0xf]
        %v2184 = vld [vmem:[#allocation6 + $0x8] sm:$0xf]
        %v2185 = vld [vmem:[#allocation6 + $0xc] sm:$0xf]
        %v2186 = vld [vmem:[#allocation6 + $0x10] sm:$0xf]
        %v2187 = vld [vmem:[#allocation6 + $0x14] sm:$0xf]
        %v2188 = vld [vmem:[#allocation6 + $0x18] sm:$0xf]
        %v2189 = vld [vmem:[#allocation6 + $0x1c] sm:$0xf]
        %v2190 = vld [vmem:[#allocation6 + $0x20] sm:$0xf]
        %v2191 = vld [vmem:[#allocation6 + $0x24] sm:$0xf]
        %v2192 = vld [vmem:[#allocation6 + $0x28] sm:$0xf]
        %v2193 = vld [vmem:[#allocation6 + $0x2c] sm:$0xf]
        %v2194 = vld [vmem:[#allocation6 + $0x30] sm:$0xf]
        %v2195 = vld [vmem:[#allocation6 + $0x34] sm:$0xf]
        %v2196 = vld [vmem:[#allocation6 + $0x38] sm:$0xf]
        %v2197 = vld [vmem:[#allocation6 + $0x3c] sm:$0xf]
        %v2198 = vld [vmem:[#allocation6 + $0x40] sm:$0xf]
        %v2199 = vld [vmem:[#allocation6 + $0x44] sm:$0xf]
        %v2200 = vld [vmem:[#allocation6 + $0x48] sm:$0xf]
        %v2201 = vld [vmem:[#allocation6 + $0x4c] sm:$0xf]
        %v2202 = vld [vmem:[#allocation6 + $0x50] sm:$0xf]
        %v2203 = vld [vmem:[#allocation6 + $0x54] sm:$0xf]
        %v2204 = vld [vmem:[#allocation6 + $0x58] sm:$0xf]
        %v2205 = vld [vmem:[#allocation6 + $0x5c] sm:$0xf]
        %v2206 = vld [vmem:[#allocation6 + $0x60] sm:$0xf]
        %v2207 = vld [vmem:[#allocation6 + $0x64] sm:$0xf]
        %v2208 = vld [vmem:[#allocation6 + $0x68] sm:$0xf]
        %v2209 = vld [vmem:[#allocation6 + $0x6c] sm:$0xf]
        %v2210 = vld [vmem:[#allocation6 + $0x70] sm:$0xf]
        %v2211 = vld [vmem:[#allocation6 + $0x74] sm:$0xf]
        %v2212 = vld [vmem:[#allocation6 + $0x78] sm:$0xf]
        %v2213 = vld [vmem:[#allocation6 + $0x7c] sm:$0xf]
        %v2214 = vld [vmem:[#allocation6 + $0x80] sm:$0xf]
        %v2215 = vld [vmem:[#allocation6 + $0x84] sm:$0xf]
        %v2216 = vld [vmem:[#allocation6 + $0x88] sm:$0xf]
        %v2217 = vld [vmem:[#allocation6 + $0x8c] sm:$0xf]
        %v2218 = vld [vmem:[#allocation6 + $0x90] sm:$0xf]
        %v2219 = vld [vmem:[#allocation6 + $0x94] sm:$0xf]
        %v2220 = vld [vmem:[#allocation6 + $0x98] sm:$0xf]
        %v2221 = vld [vmem:[#allocation6 + $0x9c] sm:$0xf]
        %v2222 = vld [vmem:[#allocation6 + $0xa0] sm:$0xf]
        %v2223 = vld [vmem:[#allocation6 + $0xa4] sm:$0xf]
        %v2224 = vld [vmem:[#allocation6 + $0xa8] sm:$0xf]
        %v2225 = vld [vmem:[#allocation6 + $0xac] sm:$0xf]
        %v2226 = vld [vmem:[#allocation6 + $0xb0] sm:$0xf]
        %v2227 = vld [vmem:[#allocation6 + $0xb4] sm:$0xf]
        %v2228 = vld [vmem:[#allocation6 + $0xb8] sm:$0xf]
        %v2229 = vld [vmem:[#allocation6 + $0xbc] sm:$0xf]
        %v2230 = vld [vmem:[#allocation7] sm:$0xf]
        %v2231 = vld [vmem:[#allocation7 + $0x4] sm:$0xf]
        %v2232 = vld [vmem:[#allocation7 + $0x8] sm:$0xf]
        %v2233 = vld [vmem:[#allocation7 + $0xc] sm:$0xf]
        %v2234 = vld [vmem:[#allocation7 + $0x10] sm:$0xf]
        %v2235 = vld [vmem:[#allocation7 + $0x14] sm:$0xf]
        %v2236 = vld [vmem:[#allocation7 + $0x18] sm:$0xf]
        %v2237 = vld [vmem:[#allocation7 + $0x1c] sm:$0xf]
        %v2238 = vld [vmem:[#allocation7 + $0x20] sm:$0xf]
        %v2239 = vld [vmem:[#allocation7 + $0x24] sm:$0xf]
        %v2240 = vld [vmem:[#allocation7 + $0x28] sm:$0xf]
        %v2241 = vld [vmem:[#allocation7 + $0x2c] sm:$0xf]
        %v2242 = vld [vmem:[#allocation7 + $0x30] sm:$0xf]
        %v2243 = vld [vmem:[#allocation7 + $0x34] sm:$0xf]
        %v2244 = vld [vmem:[#allocation7 + $0x38] sm:$0xf]
        %v2245 = vld [vmem:[#allocation7 + $0x3c] sm:$0xf]
        %v2246 = vld [vmem:[#allocation7 + $0x40] sm:$0xf]
        %v2247 = vld [vmem:[#allocation7 + $0x44] sm:$0xf]
        %v2248 = vld [vmem:[#allocation7 + $0x48] sm:$0xf]
        %v2249 = vld [vmem:[#allocation7 + $0x4c] sm:$0xf]
        %v2250 = vld [vmem:[#allocation7 + $0x50] sm:$0xf]
        %v2251 = vld [vmem:[#allocation7 + $0x54] sm:$0xf]
        %v2252 = vld [vmem:[#allocation7 + $0x58] sm:$0xf]
        %v2253 = vld [vmem:[#allocation7 + $0x5c] sm:$0xf]
        %v2254 = vld [vmem:[#allocation7 + $0x60] sm:$0xf]
        %v2255 = vld [vmem:[#allocation7 + $0x64] sm:$0xf]
        %v2256 = vld [vmem:[#allocation7 + $0x68] sm:$0xf]
        %v2257 = vld [vmem:[#allocation7 + $0x6c] sm:$0xf]
        %v2258 = vld [vmem:[#allocation7 + $0x70] sm:$0xf]
        %v2259 = vld [vmem:[#allocation7 + $0x74] sm:$0xf]
        %v2260 = vld [vmem:[#allocation7 + $0x78] sm:$0xf]
        %v2261 = vld [vmem:[#allocation7 + $0x7c] sm:$0xf]
        %v2262 = vld [vmem:[#allocation7 + $0x80] sm:$0xf]
        %v2263 = vld [vmem:[#allocation7 + $0x84] sm:$0xf]
        %v2264 = vld [vmem:[#allocation7 + $0x88] sm:$0xf]
        %v2265 = vld [vmem:[#allocation7 + $0x8c] sm:$0xf]
        %v2266 = vld [vmem:[#allocation7 + $0x90] sm:$0xf]
        %v2267 = vld [vmem:[#allocation7 + $0x94] sm:$0xf]
        %v2268 = vld [vmem:[#allocation7 + $0x98] sm:$0xf]
        %v2269 = vld [vmem:[#allocation7 + $0x9c] sm:$0xf]
        %v2270 = vld [vmem:[#allocation7 + $0xa0] sm:$0xf]
        %v2271 = vld [vmem:[#allocation7 + $0xa4] sm:$0xf]
        %v2272 = vld [vmem:[#allocation7 + $0xa8] sm:$0xf]
        %v2273 = vld [vmem:[#allocation7 + $0xac] sm:$0xf]
        %v2274 = vld [vmem:[#allocation7 + $0xb0] sm:$0xf]
        %v2275 = vld [vmem:[#allocation7 + $0xb4] sm:$0xf]
        %v2276 = vld [vmem:[#allocation7 + $0xb8] sm:$0xf]
        %v2277 = vld [vmem:[#allocation7 + $0xbc] sm:$0xf]
        %v2326 = vunpack.c.l.b16 %v2230
        %v2327 = vunpack.c.l.b16 %v2231
        %v2328 = vunpack.c.l.b16 %v2232
        %v2329 = vunpack.c.l.b16 %v2233
        %v2330 = vunpack.c.l.b16 %v2234
        %v2331 = vunpack.c.l.b16 %v2235
        %v2332 = vunpack.c.l.b16 %v2236
        %v2333 = vunpack.c.l.b16 %v2237
        %v2334 = vunpack.c.l.b16 %v2238
        %v2335 = vunpack.c.l.b16 %v2239
        %v2336 = vunpack.c.l.b16 %v2240
        %v2337 = vunpack.c.l.b16 %v2241
        %v2338 = vunpack.c.l.b16 %v2242
        %v2339 = vunpack.c.l.b16 %v2243
        %v2340 = vunpack.c.l.b16 %v2244
        %v2341 = vunpack.c.l.b16 %v2245
        %v2342 = vunpack.c.l.b16 %v2246
        %v2343 = vunpack.c.l.b16 %v2247
        %v2344 = vunpack.c.l.b16 %v2248
        %v2345 = vunpack.c.l.b16 %v2249
        %v2346 = vunpack.c.l.b16 %v2250
        %v2347 = vunpack.c.l.b16 %v2251
        %v2348 = vunpack.c.l.b16 %v2252
        %v2349 = vunpack.c.l.b16 %v2253
        %v2350 = vunpack.c.l.b16 %v2254
        %v2351 = vunpack.c.l.b16 %v2255
        %v2352 = vunpack.c.l.b16 %v2256
        %v2353 = vunpack.c.l.b16 %v2257
        %v2354 = vunpack.c.l.b16 %v2258
        %v2355 = vunpack.c.l.b16 %v2259
        %v2356 = vunpack.c.l.b16 %v2260
        %v2357 = vunpack.c.l.b16 %v2261
        %v2358 = vunpack.c.l.b16 %v2262
        %v2359 = vunpack.c.l.b16 %v2263
        %v2360 = vunpack.c.l.b16 %v2264
        %v2361 = vunpack.c.l.b16 %v2265
        %v2362 = vunpack.c.l.b16 %v2266
        %v2363 = vunpack.c.l.b16 %v2267
        %v2364 = vunpack.c.l.b16 %v2268
        %v2365 = vunpack.c.l.b16 %v2269
        %v2366 = vunpack.c.l.b16 %v2270
        %v2367 = vunpack.c.l.b16 %v2271
        %v2368 = vunpack.c.l.b16 %v2272
        %v2369 = vunpack.c.l.b16 %v2273
        %v2370 = vunpack.c.l.b16 %v2274
        %v2371 = vunpack.c.l.b16 %v2275
        %v2372 = vunpack.c.l.b16 %v2276
        %v2373 = vunpack.c.l.b16 %v2277
        %v2374 = vpack.c.b16 %v2327, %v2326
        %v2375 = vpack.c.b16 %v2329, %v2328
        %v2376 = vpack.c.b16 %v2331, %v2330
        %v2377 = vpack.c.b16 %v2333, %v2332
        %v2378 = vpack.c.b16 %v2335, %v2334
        %v2379 = vpack.c.b16 %v2337, %v2336
        %v2380 = vpack.c.b16 %v2339, %v2338
        %v2381 = vpack.c.b16 %v2341, %v2340
        %v2382 = vpack.c.b16 %v2343, %v2342
        %v2383 = vpack.c.b16 %v2345, %v2344
        %v2384 = vpack.c.b16 %v2347, %v2346
        %v2385 = vpack.c.b16 %v2349, %v2348
        %v2386 = vpack.c.b16 %v2351, %v2350
        %v2387 = vpack.c.b16 %v2353, %v2352
        %v2388 = vpack.c.b16 %v2355, %v2354
        %v2389 = vpack.c.b16 %v2357, %v2356
        %v2390 = vpack.c.b16 %v2359, %v2358
        %v2391 = vpack.c.b16 %v2361, %v2360
        %v2392 = vpack.c.b16 %v2363, %v2362
        %v2393 = vpack.c.b16 %v2365, %v2364
        %v2394 = vpack.c.b16 %v2367, %v2366
        %v2395 = vpack.c.b16 %v2369, %v2368
        %v2396 = vpack.c.b16 %v2371, %v2370
        %v2397 = vpack.c.b16 %v2373, %v2372
        %2422 = vmatprep.subr.bf16.mxu0 0
        %2423 = vmatpush1.bf16.msra.mxu0 %v2374
        %2424 = vmatprep.subr.bf16.mxu0 0
        %2425 = vmatpush1.bf16.msra.mxu0 %v2375
        %2426 = vmatprep.subr.bf16.mxu0 0
        %2427 = vmatpush1.bf16.msra.mxu0 %v2376
        %2428 = vmatprep.subr.bf16.mxu0 0
        %2429 = vmatpush1.bf16.msra.mxu0 %v2377
        %2430 = vmatprep.subr.bf16.mxu0 0
        %2431 = vmatpush1.bf16.msra.mxu0 %v2378
        %2432 = vmatprep.subr.bf16.mxu0 0
        %2433 = vmatpush1.bf16.msra.mxu0 %v2379
        %2434 = vmatprep.subr.bf16.mxu0 0
        %2435 = vmatpush1.bf16.msra.mxu0 %v2380
        %2436 = vmatprep.subr.bf16.mxu0 0
        %2437 = vmatpush1.bf16.msra.mxu0 %v2381
        %2438 = vmatprep.subr.bf16.mxu0 0
        %2439 = vmatpush1.bf16.msra.mxu0 %v2382
        %2440 = vmatprep.subr.bf16.mxu0 0
        %2441 = vmatpush1.bf16.msra.mxu0 %v2383
        %2442 = vmatprep.subr.bf16.mxu0 0
        %2443 = vmatpush1.bf16.msra.mxu0 %v2384
        %2444 = vmatprep.subr.bf16.mxu0 0
        %2445 = vmatpush1.bf16.msra.mxu0 %v2385
        %2446 = vmatprep.subr.bf16.mxu0 0
        %2447 = vmatpush1.bf16.msra.mxu0 %v2386
        %2448 = vmatprep.subr.bf16.mxu0 0
        %2449 = vmatpush1.bf16.msra.mxu0 %v2387
        %2450 = vmatprep.subr.bf16.mxu0 0
        %2451 = vmatpush1.bf16.msra.mxu0 %v2388
        %2452 = vmatprep.subr.bf16.mxu0 0
        %2453 = vmatpush1.bf16.msra.mxu0 %v2389
        %2454 = vmatprep.mubr.bf16.mxu0 %v2180
        %2455 = vmatmul.mubr.bf16.gmra.mrb[0].mxu0 %v2179
        %v2456 = vpop.f32.mrb[0].mxu0
        %v2457 = vadd.f32 0.0, %v2456
        %v2458 = vpop.f32.mrb[0].mxu0
        %v2459 = vpop.f32.mrb[0].mxu0
        %v2460 = vadd.f32 0.0, %v2459
        %v2461 = vpop.f32.mrb[0].mxu0
        %2462 = vdwg.mxu0
        %2463 = vmatprep.subr.bf16.mxu0 0
        %2464 = vmatpush1.bf16.msra.mxu0 %v2390
        %2465 = vmatprep.subr.bf16.mxu0 0
        %2466 = vmatpush1.bf16.msra.mxu0 %v2391
        %2467 = vmatprep.subr.bf16.mxu0 0
        %2468 = vmatpush1.bf16.msra.mxu0 %v2392
        %2469 = vmatprep.subr.bf16.mxu0 0
        %2470 = vmatpush1.bf16.msra.mxu0 %v2393
        %2471 = vmatprep.subr.bf16.mxu0 0
        %2472 = vmatpush1.bf16.msra.mxu0 %v2394
        %2473 = vmatprep.subr.bf16.mxu0 0
        %2474 = vmatpush1.bf16.msra.mxu0 %v2395
        %2475 = vmatprep.subr.bf16.mxu0 0
        %2476 = vmatpush1.bf16.msra.mxu0 %v2396
        %2477 = vmatprep.subr.bf16.mxu0 0
        %2478 = vmatpush1.bf16.msra.mxu0 %v2397
        %2479 = vmatprep.subr.bf16.mxu0 0
        %2480 = vmatpush1.bf16.msra.mxu0 0
        %2481 = vmatprep.subr.bf16.mxu0 0
        %2482 = vmatpush1.bf16.msra.mxu0 0
        %2483 = vmatprep.subr.bf16.mxu0 0
        %2484 = vmatpush1.bf16.msra.mxu0 0
        %2485 = vmatprep.subr.bf16.mxu0 0
        %2486 = vmatpush1.bf16.msra.mxu0 0
        %2487 = vmatprep.subr.bf16.mxu0 0
        %2488 = vmatpush1.bf16.msra.mxu0 0
        %2489 = vmatprep.subr.bf16.mxu0 0
        %2490 = vmatpush1.bf16.msra.mxu0 0
        %2491 = vmatprep.subr.bf16.mxu0 0
        %2492 = vmatpush1.bf16.msra.mxu0 0
        %2493 = vmatprep.subr.bf16.mxu0 0
        %2494 = vmatpush1.bf16.msra.mxu0 0
        %2495 = vmatprep.mubr.bf16.mxu0 0
        %2496 = vmatmul.mubr.bf16.gmra.mrb[0].mxu0 %v2181
        %v2497 = vpop.f32.mrb[0].mxu0
        %v2498 = vadd.f32 %v2457, %v2497
        %v2499 = vpop.f32.mrb[0].mxu0
        %v2500 = vpop.f32.mrb[0].mxu0
        %v2501 = vadd.f32 %v2460, %v2500
        %v2502 = vpop.f32.mrb[0].mxu0
        %2503 = vdwg.mxu0
        %v2552 = vunpack.c.l.b16 %v2182
        %v2553 = vunpack.c.l.b16 %v2183
        %v2554 = vunpack.c.l.b16 %v2184
        %v2555 = vunpack.c.l.b16 %v2185
        %v2556 = vunpack.c.l.b16 %v2186
        %v2557 = vunpack.c.l.b16 %v2187
        %v2558 = vunpack.c.l.b16 %v2188
        %v2559 = vunpack.c.l.b16 %v2189
        %v2560 = vunpack.c.l.b16 %v2190
        %v2561 = vunpack.c.l.b16 %v2191
        %v2562 = vunpack.c.l.b16 %v2192
        %v2563 = vunpack.c.l.b16 %v2193
        %v2564 = vunpack.c.l.b16 %v2194
        %v2565 = vunpack.c.l.b16 %v2195
        %v2566 = vunpack.c.l.b16 %v2196
        %v2567 = vunpack.c.l.b16 %v2197
        %v2568 = vunpack.c.l.b16 %v2198
        %v2569 = vunpack.c.l.b16 %v2199
        %v2570 = vunpack.c.l.b16 %v2200
        %v2571 = vunpack.c.l.b16 %v2201
        %v2572 = vunpack.c.l.b16 %v2202
        %v2573 = vunpack.c.l.b16 %v2203
        %v2574 = vunpack.c.l.b16 %v2204
        %v2575 = vunpack.c.l.b16 %v2205
        %v2576 = vunpack.c.l.b16 %v2206
        %v2577 = vunpack.c.l.b16 %v2207
        %v2578 = vunpack.c.l.b16 %v2208
        %v2579 = vunpack.c.l.b16 %v2209
        %v2580 = vunpack.c.l.b16 %v2210
        %v2581 = vunpack.c.l.b16 %v2211
        %v2582 = vunpack.c.l.b16 %v2212
        %v2583 = vunpack.c.l.b16 %v2213
        %v2584 = vunpack.c.l.b16 %v2214
        %v2585 = vunpack.c.l.b16 %v2215
        %v2586 = vunpack.c.l.b16 %v2216
        %v2587 = vunpack.c.l.b16 %v2217
        %v2588 = vunpack.c.l.b16 %v2218
        %v2589 = vunpack.c.l.b16 %v2219
        %v2590 = vunpack.c.l.b16 %v2220
        %v2591 = vunpack.c.l.b16 %v2221
        %v2592 = vunpack.c.l.b16 %v2222
        %v2593 = vunpack.c.l.b16 %v2223
        %v2594 = vunpack.c.l.b16 %v2224
        %v2595 = vunpack.c.l.b16 %v2225
        %v2596 = vunpack.c.l.b16 %v2226
        %v2597 = vunpack.c.l.b16 %v2227
        %v2598 = vunpack.c.l.b16 %v2228
        %v2599 = vunpack.c.l.b16 %v2229
        %v2600 = vpack.c.b16 %v2553, %v2552
        %v2601 = vpack.c.b16 %v2555, %v2554
        %v2602 = vpack.c.b16 %v2557, %v2556
        %v2603 = vpack.c.b16 %v2559, %v2558
        %v2604 = vpack.c.b16 %v2561, %v2560
        %v2605 = vpack.c.b16 %v2563, %v2562
        %v2606 = vpack.c.b16 %v2565, %v2564
        %v2607 = vpack.c.b16 %v2567, %v2566
        %v2608 = vpack.c.b16 %v2569, %v2568
        %v2609 = vpack.c.b16 %v2571, %v2570
        %v2610 = vpack.c.b16 %v2573, %v2572
        %v2611 = vpack.c.b16 %v2575, %v2574
        %v2612 = vpack.c.b16 %v2577, %v2576
        %v2613 = vpack.c.b16 %v2579, %v2578
        %v2614 = vpack.c.b16 %v2581, %v2580
        %v2615 = vpack.c.b16 %v2583, %v2582
        %v2616 = vpack.c.b16 %v2585, %v2584
        %v2617 = vpack.c.b16 %v2587, %v2586
        %v2618 = vpack.c.b16 %v2589, %v2588
        %v2619 = vpack.c.b16 %v2591, %v2590
        %v2620 = vpack.c.b16 %v2593, %v2592
        %v2621 = vpack.c.b16 %v2595, %v2594
        %v2622 = vpack.c.b16 %v2597, %v2596
        %v2623 = vpack.c.b16 %v2599, %v2598
        %2648 = vmatprep.subr.bf16.mxu0 0
        %2649 = vmatpush1.bf16.msra.mxu0 %v2600
        %2650 = vmatprep.subr.bf16.mxu0 0
        %2651 = vmatpush1.bf16.msra.mxu0 %v2601
        %2652 = vmatprep.subr.bf16.mxu0 0
        %2653 = vmatpush1.bf16.msra.mxu0 %v2602
        %2654 = vmatprep.subr.bf16.mxu0 0
        %2655 = vmatpush1.bf16.msra.mxu0 %v2603
        %2656 = vmatprep.subr.bf16.mxu0 0
        %2657 = vmatpush1.bf16.msra.mxu0 %v2604
        %2658 = vmatprep.subr.bf16.mxu0 0
        %2659 = vmatpush1.bf16.msra.mxu0 %v2605
        %2660 = vmatprep.subr.bf16.mxu0 0
        %2661 = vmatpush1.bf16.msra.mxu0 %v2606
        %2662 = vmatprep.subr.bf16.mxu0 0
        %2663 = vmatpush1.bf16.msra.mxu0 %v2607
        %2664 = vmatprep.subr.bf16.mxu0 0
        %2665 = vmatpush1.bf16.msra.mxu0 %v2608
        %2666 = vmatprep.subr.bf16.mxu0 0
        %2667 = vmatpush1.bf16.msra.mxu0 %v2609
        %2668 = vmatprep.subr.bf16.mxu0 0
        %2669 = vmatpush1.bf16.msra.mxu0 %v2610
        %2670 = vmatprep.subr.bf16.mxu0 0
        %2671 = vmatpush1.bf16.msra.mxu0 %v2611
        %2672 = vmatprep.subr.bf16.mxu0 0
        %2673 = vmatpush1.bf16.msra.mxu0 %v2612
        %2674 = vmatprep.subr.bf16.mxu0 0
        %2675 = vmatpush1.bf16.msra.mxu0 %v2613
        %2676 = vmatprep.subr.bf16.mxu0 0
        %2677 = vmatpush1.bf16.msra.mxu0 %v2614
        %2678 = vmatprep.subr.bf16.mxu0 0
        %2679 = vmatpush1.bf16.msra.mxu0 %v2615
        %2680 = vmatprep.mubr.bf16.mxu0 %v2147
        %2681 = vmatmul.mubr.bf16.gmra.mrb[0].mxu0 %v2146
        %v2682 = vpop.f32.mrb[0].mxu0
        %v2683 = vadd.f32 %v2498, %v2682
        %v2684 = vpop.f32.mrb[0].mxu0
        %v2685 = vpop.f32.mrb[0].mxu0
        %v2686 = vadd.f32 %v2501, %v2685
        %v2687 = vpop.f32.mrb[0].mxu0
        %2688 = vdwg.mxu0
        %2689 = vmatprep.subr.bf16.mxu0 0
        %2690 = vmatpush1.bf16.msra.mxu0 %v2616
        %2691 = vmatprep.subr.bf16.mxu0 0
        %2692 = vmatpush1.bf16.msra.mxu0 %v2617
        %2693 = vmatprep.subr.bf16.mxu0 0
        %2694 = vmatpush1.bf16.msra.mxu0 %v2618
        %2695 = vmatprep.subr.bf16.mxu0 0
        %2696 = vmatpush1.bf16.msra.mxu0 %v2619
        %2697 = vmatprep.subr.bf16.mxu0 0
        %2698 = vmatpush1.bf16.msra.mxu0 %v2620
        %2699 = vmatprep.subr.bf16.mxu0 0
        %2700 = vmatpush1.bf16.msra.mxu0 %v2621
        %2701 = vmatprep.subr.bf16.mxu0 0
        %2702 = vmatpush1.bf16.msra.mxu0 %v2622
        %2703 = vmatprep.subr.bf16.mxu0 0
        %2704 = vmatpush1.bf16.msra.mxu0 %v2623
        %2705 = vmatprep.subr.bf16.mxu0 0
        %2706 = vmatpush1.bf16.msra.mxu0 0
        %2707 = vmatprep.subr.bf16.mxu0 0
        %2708 = vmatpush1.bf16.msra.mxu0 0
        %2709 = vmatprep.subr.bf16.mxu0 0
        %2710 = vmatpush1.bf16.msra.mxu0 0
        %2711 = vmatprep.subr.bf16.mxu0 0
        %2712 = vmatpush1.bf16.msra.mxu0 0
        %2713 = vmatprep.subr.bf16.mxu0 0
        %2714 = vmatpush1.bf16.msra.mxu0 0
        %2715 = vmatprep.subr.bf16.mxu0 0
        %2716 = vmatpush1.bf16.msra.mxu0 0
        %2717 = vmatprep.subr.bf16.mxu0 0
        %2718 = vmatpush1.bf16.msra.mxu0 0
        %2719 = vmatprep.subr.bf16.mxu0 0
        %2720 = vmatpush1.bf16.msra.mxu0 0
        %2721 = vmatprep.mubr.bf16.mxu0 0
        %2722 = vmatmul.mubr.bf16.gmra.mrb[0].mxu0 %v2148
        %v2723 = vpop.f32.mrb[0].mxu0
        %v2724 = vadd.f32 %v2683, %v2723
        %v2725 = vpop.f32.mrb[0].mxu0
        %v2726 = vpop.f32.mrb[0].mxu0
        %v2727 = vadd.f32 %v2686, %v2726
        %v2728 = vpop.f32.mrb[0].mxu0
        %2729 = vdwg.mxu0
        %v2730 = vld [vmem:[%s7] sm:$0x1]
        %v2732 = vlaneseq
        %v2733 = vshrl.u32 %v2732, 7
        %v2734 = vsub.s32 0, %v2733
        %v2735 = vrot.slane %v2730, %v2734
        %v2737 = vadd.f32 %v2724, %v2735
        %v2738 = vadd.f32 %v2727, %v2735
        %v2739 = vmax.f32 %v2737, 0.0
        %v2740 = vmax.f32 %v2738, 0.0
        %v2741 = vmin.f32 %v2739, 1.0
        %v2742 = vmin.f32 %v2740, 1.0
        %v2743 = vpack.c.bf16 %v2742, %v2741
        %v2744 = vld [vmem:[#allocation9] sm:$0xf]
        %v2745 = vld [vmem:[#allocation9 + $0x4] sm:$0xf]
        %v2746 = vld [vmem:[#allocation9 + $0x8] sm:$0xf]
        %v2747 = vld [vmem:[#allocation9 + $0xc] sm:$0xf]
        %v2748 = vld [vmem:[#allocation9 + $0x10] sm:$0xf]
        %v2749 = vld [vmem:[#allocation9 + $0x14] sm:$0xf]
        %v2750 = vld [vmem:[#allocation9 + $0x18] sm:$0xf]
        %v2751 = vld [vmem:[#allocation9 + $0x1c] sm:$0xf]
        %v2752 = vld [vmem:[#allocation9 + $0x20] sm:$0xf]
        %v2753 = vld [vmem:[#allocation9 + $0x24] sm:$0xf]
        %v2754 = vld [vmem:[#allocation9 + $0x28] sm:$0xf]
        %v2755 = vld [vmem:[#allocation9 + $0x2c] sm:$0xf]
        %v2756 = vld [vmem:[#allocation9 + $0x30] sm:$0xf]
        %v2757 = vld [vmem:[#allocation9 + $0x34] sm:$0xf]
        %v2758 = vld [vmem:[#allocation9 + $0x38] sm:$0xf]
        %v2759 = vld [vmem:[#allocation9 + $0x3c] sm:$0xf]
        %v2760 = vld [vmem:[%s9] sm:$0x1]
        %v2762 = vlaneseq
        %v2763 = vshrl.u32 %v2762, 7
        %v2764 = vsub.s32 0, %v2763
        %v2765 = vrot.slane %v2760, %v2764
        %v2783 = vunpack.c.l.b16 %v2744
        %v2784 = vunpack.c.l.b16 %v2745
        %v2785 = vunpack.c.l.b16 %v2746
        %v2786 = vunpack.c.l.b16 %v2747
        %v2787 = vunpack.c.l.b16 %v2748
        %v2788 = vunpack.c.l.b16 %v2749
        %v2789 = vunpack.c.l.b16 %v2750
        %v2790 = vunpack.c.l.b16 %v2751
        %v2791 = vunpack.c.l.b16 %v2752
        %v2792 = vunpack.c.l.b16 %v2753
        %v2793 = vunpack.c.l.b16 %v2754
        %v2794 = vunpack.c.l.b16 %v2755
        %v2795 = vunpack.c.l.b16 %v2756
        %v2796 = vunpack.c.l.b16 %v2757
        %v2797 = vunpack.c.l.b16 %v2758
        %v2798 = vunpack.c.l.b16 %v2759
        %v2799 = vpack.c.b16 %v2784, %v2783
        %v2800 = vpack.c.b16 %v2786, %v2785
        %v2801 = vpack.c.b16 %v2788, %v2787
        %v2802 = vpack.c.b16 %v2790, %v2789
        %v2803 = vpack.c.b16 %v2792, %v2791
        %v2804 = vpack.c.b16 %v2794, %v2793
        %v2805 = vpack.c.b16 %v2796, %v2795
        %v2806 = vpack.c.b16 %v2798, %v2797
        %2815 = vmatprep.subr.bf16.mxu0 0
        %2816 = vmatpush1.bf16.msra.mxu0 %v2799
        %2817 = vmatprep.subr.bf16.mxu0 0
        %2818 = vmatpush1.bf16.msra.mxu0 %v2800
        %2819 = vmatprep.subr.bf16.mxu0 0
        %2820 = vmatpush1.bf16.msra.mxu0 %v2801
        %2821 = vmatprep.subr.bf16.mxu0 0
        %2822 = vmatpush1.bf16.msra.mxu0 %v2802
        %2823 = vmatprep.subr.bf16.mxu0 0
        %2824 = vmatpush1.bf16.msra.mxu0 %v2803
        %2825 = vmatprep.subr.bf16.mxu0 0
        %2826 = vmatpush1.bf16.msra.mxu0 %v2804
        %2827 = vmatprep.subr.bf16.mxu0 0
        %2828 = vmatpush1.bf16.msra.mxu0 %v2805
        %2829 = vmatprep.subr.bf16.mxu0 0
        %2830 = vmatpush1.bf16.msra.mxu0 %v2806
        %2831 = vmatprep.subr.bf16.mxu0 0
        %2832 = vmatpush1.bf16.msra.mxu0 0
        %2833 = vmatprep.subr.bf16.mxu0 0
        %2834 = vmatpush1.bf16.msra.mxu0 0
        %2835 = vmatprep.subr.bf16.mxu0 0
        %2836 = vmatpush1.bf16.msra.mxu0 0
        %2837 = vmatprep.subr.bf16.mxu0 0
        %2838 = vmatpush1.bf16.msra.mxu0 0
        %2839 = vmatprep.subr.bf16.mxu0 0
        %2840 = vmatpush1.bf16.msra.mxu0 0
        %2841 = vmatprep.subr.bf16.mxu0 0
        %2842 = vmatpush1.bf16.msra.mxu0 0
        %2843 = vmatprep.subr.bf16.mxu0 0
        %2844 = vmatpush1.bf16.msra.mxu0 0
        %2845 = vmatprep.subr.bf16.mxu0 0
        %2846 = vmatpush1.bf16.msra.mxu0 0
        %2847 = vmatprep.mubr.bf16.mxu0 0
        %2848 = vmatmul.mubr.bf16.gmra.mrb[0].mxu0 %v2743
        %v2849 = vpop.f32.mrb[0].mxu0
        %v2850 = vadd.f32 %v2765, %v2849
        %v2851 = vpop.f32.mrb[0].mxu0
        %v2852 = vpop.f32.mrb[0].mxu0
        %v2853 = vadd.f32 %v2765, %v2852
        %v2854 = vpop.f32.mrb[0].mxu0
        %2855 = vdwg.mxu0
        %v2856 = vmax.f32 %v2850, 0.0
        %v2857 = vmax.f32 %v2853, 0.0
        %v2858 = vmin.f32 %v2856, 1.0
        %v2859 = vmin.f32 %v2857, 1.0
        %v2860 = vpack.c.bf16 %v2859, %v2858
        %v2861 = vld [vmem:[%s10] sm:$0xf]
        %v2862 = vld [vmem:[%s10 + $0x4] sm:$0xf]
        %v2863 = vld [vmem:[%s10 + $0x8] sm:$0xf]
        %v2864 = vld [vmem:[%s10 + $0xc] sm:$0xf]
        %v2865 = vld [vmem:[%s10 + $0x10] sm:$0xf]
        %v2866 = vld [vmem:[%s10 + $0x14] sm:$0xf]
        %v2867 = vld [vmem:[%s10 + $0x18] sm:$0xf]
        %v2868 = vld [vmem:[%s10 + $0x1c] sm:$0xf]
        %v2869 = vld [vmem:[%s10 + $0x20] sm:$0xf]
        %v2870 = vld [vmem:[%s10 + $0x24] sm:$0xf]
        %v2871 = vld [vmem:[%s10 + $0x28] sm:$0xf]
        %v2872 = vld [vmem:[%s10 + $0x2c] sm:$0xf]
        %v2873 = vld [vmem:[%s10 + $0x30] sm:$0xf]
        %v2874 = vld [vmem:[%s10 + $0x34] sm:$0xf]
        %v2875 = vld [vmem:[%s10 + $0x38] sm:$0xf]
        %v2876 = vld [vmem:[%s10 + $0x3c] sm:$0xf]
        %v2877 = vld [vmem:[%s11] sm:$0x1]
        %v2879 = vlaneseq
        %v2880 = vshrl.u32 %v2879, 7
        %v2881 = vsub.s32 0, %v2880
        %v2882 = vrot.slane %v2877, %v2881
        %v2900 = vunpack.c.l.b16 %v2861
        %v2901 = vunpack.c.l.b16 %v2862
        %v2902 = vunpack.c.l.b16 %v2863
        %v2903 = vunpack.c.l.b16 %v2864
        %v2904 = vunpack.c.l.b16 %v2865
        %v2905 = vunpack.c.l.b16 %v2866
        %v2906 = vunpack.c.l.b16 %v2867
        %v2907 = vunpack.c.l.b16 %v2868
        %v2908 = vunpack.c.l.b16 %v2869
        %v2909 = vunpack.c.l.b16 %v2870
        %v2910 = vunpack.c.l.b16 %v2871
        %v2911 = vunpack.c.l.b16 %v2872
        %v2912 = vunpack.c.l.b16 %v2873
        %v2913 = vunpack.c.l.b16 %v2874
        %v2914 = vunpack.c.l.b16 %v2875
        %v2915 = vunpack.c.l.b16 %v2876
        %v2916 = vpack.c.b16 %v2901, %v2900
        %v2917 = vpack.c.b16 %v2903, %v2902
        %v2918 = vpack.c.b16 %v2905, %v2904
        %v2919 = vpack.c.b16 %v2907, %v2906
        %v2920 = vpack.c.b16 %v2909, %v2908
        %v2921 = vpack.c.b16 %v2911, %v2910
        %v2922 = vpack.c.b16 %v2913, %v2912
        %v2923 = vpack.c.b16 %v2915, %v2914
        %2932 = vmatprep.subr.bf16.mxu0 0
        %2933 = vmatpush1.bf16.msra.mxu0 %v2916
        %2934 = vmatprep.subr.bf16.mxu0 0
        %2935 = vmatpush1.bf16.msra.mxu0 %v2917
        %2936 = vmatprep.subr.bf16.mxu0 0
        %2937 = vmatpush1.bf16.msra.mxu0 %v2918
        %2938 = vmatprep.subr.bf16.mxu0 0
        %2939 = vmatpush1.bf16.msra.mxu0 %v2919
        %2940 = vmatprep.subr.bf16.mxu0 0
        %2941 = vmatpush1.bf16.msra.mxu0 %v2920
        %2942 = vmatprep.subr.bf16.mxu0 0
        %2943 = vmatpush1.bf16.msra.mxu0 %v2921
        %2944 = vmatprep.subr.bf16.mxu0 0
        %2945 = vmatpush1.bf16.msra.mxu0 %v2922
        %2946 = vmatprep.subr.bf16.mxu0 0
        %2947 = vmatpush1.bf16.msra.mxu0 %v2923
        %2948 = vmatprep.subr.bf16.mxu0 0
        %2949 = vmatpush1.bf16.msra.mxu0 0
        %2950 = vmatprep.subr.bf16.mxu0 0
        %2951 = vmatpush1.bf16.msra.mxu0 0
        %2952 = vmatprep.subr.bf16.mxu0 0
        %2953 = vmatpush1.bf16.msra.mxu0 0
        %2954 = vmatprep.subr.bf16.mxu0 0
        %2955 = vmatpush1.bf16.msra.mxu0 0
        %2956 = vmatprep.subr.bf16.mxu0 0
        %2957 = vmatpush1.bf16.msra.mxu0 0
        %2958 = vmatprep.subr.bf16.mxu0 0
        %2959 = vmatpush1.bf16.msra.mxu0 0
        %2960 = vmatprep.subr.bf16.mxu0 0
        %2961 = vmatpush1.bf16.msra.mxu0 0
        %2962 = vmatprep.subr.bf16.mxu0 0
        %2963 = vmatpush1.bf16.msra.mxu0 0
        %2964 = vmatprep.mubr.bf16.mxu0 0
        %2965 = vmatmul.mubr.bf16.gmra.mrb[0].mxu0 %v2860
        %v2966 = vpop.f32.mrb[0].mxu0
        %v2967 = vadd.f32 %v2882, %v2966
        %v2968 = vpop.f32.mrb[0].mxu0
        %v2969 = vpop.f32.mrb[0].mxu0
        %v2970 = vadd.f32 %v2882, %v2969
        %v2971 = vpop.f32.mrb[0].mxu0
        %2972 = vdwg.mxu0
        %vm2973 = vcmask 64512
        %2974 = vst.msk [vmem:[%s540] sm:$0xff] %vm2973, %v2967
        %2975 = vst.msk [vmem:[%s540 + $0x8] sm:$0xff] %vm2973, %v2970
        %s2976 = smul.u32 2, %s28
        %p2977 = scmp.lt.s32.totalorder %s2976, 3
        %s2978 = scalar_select %p2977, %s2976, 3
        %s2979 = smul.addr %s2978, 8
        %s2980 = scalar_lea.vmem %s12, %s2979
        // Predicated region
        $region89: #{tpu_custom_call.1} parent=67 // pred_check
          %p2981 = pneg %p313
        $region90: #{tpu_custom_call.1} parent=67 // pred_check_branch
          %2983 = sbr.rel (%p2981) target = $region92
        $region91: #{tpu_custom_call.1} parent=67 // pred_region
          %s2984 = smul.u32 2, %s28
        $region92: #{tpu_custom_call.1} parent=67 // pred_fallthru
          _
      $region68: #{tpu_custom_call.1} parent=5 // pred_fallthru
        _
      %p2985 = scmp.le.s32.totalorder 2, %s23
      // Predicated region
      $region93: #{tpu_custom_call.1} parent=5 // pred_check
        %p2986 = pneg %p2985
      $region94: #{tpu_custom_call.1} parent=5 // pred_check_branch
        %2988 = sbr.rel (%p2986) target = $region96
      $region95: #{tpu_custom_call.1} parent=5 // pred_region
        %s2989 = ssub.s32 %s23, 2
        // Predicated region
        $region97: #{tpu_custom_call.1} parent=95 // pred_check
          %p2990 = pneg %p319
        $region98: #{tpu_custom_call.1} parent=95 // pred_check_branch
          %2992 = sbr.rel (%p2990) target = $region100
        $region99: #{tpu_custom_call.1} parent=95 // pred_region
          %s2993 = smul.u32 2, %s29
          %p2994 = scmp.lt.s32.totalorder %s2993, 3
          %s2995 = scalar_select %p2994, %s2993, 3
          %s2996 = smul.addr %s2995, 8
          %s2997 = scalar_lea.vmem %s12, %s2996
        $region100: #{tpu_custom_call.1} parent=95 // pred_fallthru
          _
      $region96: #{tpu_custom_call.1} parent=5 // pred_fallthru
        _
    $region6: #{tpu_custom_call.1} parent=1 // loop_footer
      %s27 = sadd.s32 1, %s23
    $region7: #{tpu_custom_call.1} parent=1 // loop_footer_branch
      %22 = sbr.rel target = $region3
    $region8: #{tpu_custom_call.1} parent=1 // loop_exit
      _
    %2998 = vsyncpa [#allocation3], 1
    %s2999 = scalar_lea.sflag [#allocation3], 1
    %3000 = vsyncpa %s2999, 1
    %3001 = vsyncpa [#allocation5], 1
    %3002 = vsyncpa [#allocation8], 1

</llo_original>
